<compile_context>
chip_gen: v7x
topology: tpu7x:2x2x1
jax: 0.10.0
libtpu: 0.0.40
codegen_flags: <defaults>
</compile_context>

<pallas_src>
import functools

import jax
import jax.numpy as jnp
from jax.experimental import pallas as pl
from jax.experimental.pallas import tpu as pltpu


def _mtrnn_kernel(h0_ref, x_ref, wih_t_ref, whh_t_ref, bias_ref, out_ref,
                  h_scratch, *, tau, t_blk):
    """One grid step == one block of `t_blk` RNN time steps.

    h0_ref:    (E, H)          initial hidden state (read only at block 0)
    x_ref:     (E, t_blk, D)   raw inputs for this time block
    wih_t_ref: (D, H)          W_ih^T (resident across all blocks)
    whh_t_ref: (H, H)          W_hh^T (resident across all blocks)
    bias_ref:  (1, H) f32      bias row (broadcasts over episodes)
    out_ref:   (E, t_blk, H)   episode-major output block
    h_scratch: (E, H) f32      hidden state carried across time blocks
    """
    blk = pl.program_id(0)

    @pl.when(blk == 0)
    def _():
        h_scratch[...] = h0_ref[...].astype(jnp.float32)

    # Hoist weight/bias loads out of the unrolled loop (no per-step reloads).
    wih = wih_t_ref[...]
    whh = whh_t_ref[...]
    bias = bias_ref[...]

    inv_tau = 1.0 / tau
    decay = 1.0 - inv_tau

    h = h_scratch[...]                       # (E, H) f32 carried state
    # Static (unrolled) loop over the time block: all Ref indices are
    # compile-time constants, so every load/store is a plain static slice.
    # t_blk is kept small (<= 64) so the unroll stays cheap; the grid handles
    # long sequences.
    for t in range(t_blk):
        # The x-projection does not depend on h, so it overlaps the serial
        # h @ Whh -> tanh -> blend chain of the previous step in the schedule.
        lin = (jnp.dot(x_ref[:, t, :], wih, preferred_element_type=jnp.float32)
               + jnp.dot(h.astype(whh.dtype), whh,
                         preferred_element_type=jnp.float32)
               + bias)
        h = decay * h + inv_tau * jnp.tanh(lin)
        out_ref[:, t, :] = h.astype(out_ref.dtype)

    h_scratch[...] = h


def mtrnn_forward(x, hx, w_ih, w_hh, bias, time_constant, *, t_blk=None):
    """x: (episodes, steps, input_size); hx: (episodes, steps, hidden_size).

    Returns (outputs[:, -1:], outputs) with outputs (episodes, steps, hidden),
    matching MTRNN.forward.
    """
    E, S, D = x.shape
    H = w_ih.shape[0]

    if t_blk is None:
        t_blk = S
        if S > 64:  # cap unroll length; pick a multiple-of-8 divisor of S
            for cand in (64, 32, 16, 8):
                if S % cand == 0:
                    t_blk = cand
                    break
    assert S % t_blk == 0 and (t_blk == S or t_blk % 8 == 0), (
        "t_blk must divide S and (for partial blocks) be a multiple of 8")

    h0 = hx[:, 0, :]                         # (E, H) initial hidden state
    wih_t = jnp.transpose(w_ih)              # (D, H) -- one-time tiny transpose
    whh_t = jnp.transpose(w_hh)              # (H, H)
    bias2d = bias.reshape(1, H).astype(jnp.float32)

    kernel = functools.partial(_mtrnn_kernel,
                               tau=float(time_constant), t_blk=t_blk)

    # TODO(synk): for large E on v7x, add a parallel episode-tile grid axis
    # (dimension_semantics=("parallel", "arbitrary")); with E=2 there is no
    # second >=8-row block to give the other TensorCore.
    outputs = pl.pallas_call(
        kernel,
        out_shape=jax.ShapeDtypeStruct((E, S, H), x.dtype),
        grid_spec=pltpu.PrefetchScalarGridSpec(
            num_scalar_prefetch=0,
            grid=(S // t_blk,),
            in_specs=[
                pl.BlockSpec((E, H), lambda b: (0, 0)),            # h0
                pl.BlockSpec((E, t_blk, D), lambda b: (0, b, 0)),  # x block
                pl.BlockSpec((D, H), lambda b: (0, 0)),            # W_ih^T
                pl.BlockSpec((H, H), lambda b: (0, 0)),            # W_hh^T
                pl.BlockSpec((1, H), lambda b: (0, 0)),            # bias
            ],
            out_specs=pl.BlockSpec((E, t_blk, H), lambda b: (0, b, 0)),
            scratch_shapes=[pltpu.VMEM((E, H), jnp.float32)],
        ),
        compiler_params=pltpu.CompilerParams(
            dimension_semantics=("arbitrary",)),  # time is sequential
    )(h0, x, wih_t, whh_t, bias2d)

    last = outputs[:, -1:, :]                # (E, 1, H)
    return last, outputs


def _reference(x, hx, w_ih, w_hh, bias, tau):
    """Pure-JAX reference of the intended recurrence (for a sanity check)."""
    def step(h, x_t):
        lin = x_t @ w_ih.T + h @ w_hh.T + bias
        h_new = (1.0 - 1.0 / tau) * h + (1.0 / tau) * jnp.tanh(lin)
        return h_new, h_new

    x_tm = jnp.transpose(x, (1, 0, 2))
    _, ys = jax.lax.scan(step, hx[:, 0, :], x_tm)
    outputs = jnp.transpose(ys, (1, 0, 2))
    return outputs[:, -1:, :], outputs


if __name__ == "__main__":
    # Small shapes consistent with the module's forward.
    episodes, steps = 2, 8
    input_size, hidden_size = 16, 32
    time_constant = 2.0

    key = jax.random.PRNGKey(0)
    k_x, k_h, k_wi, k_wh, k_b = jax.random.split(key, 5)

    x = jax.random.normal(k_x, (episodes, steps, input_size), jnp.float32)
    hx = jax.random.normal(k_h, (episodes, steps, hidden_size), jnp.float32)

    # Deterministic synthetic parameters (PyTorch module leaves them uninitialized).
    w_ih = jax.random.normal(k_wi, (hidden_size, input_size), jnp.float32) * 0.1
    w_hh = jax.random.normal(k_wh, (hidden_size, hidden_size), jnp.float32) * 0.1
    bias = jax.random.normal(k_b, (hidden_size,), jnp.float32) * 0.1

    last, outputs = jax.jit(
        functools.partial(mtrnn_forward, time_constant=time_constant)
    )(x, hx, w_ih, w_hh, bias)
    jax.block_until_ready((last, outputs))

    ref_last, ref_outputs = _reference(x, hx, w_ih, w_hh, bias, time_constant)
    assert outputs.shape == (episodes, steps, hidden_size)
    assert last.shape == (episodes, 1, hidden_size)
    assert jnp.allclose(outputs, ref_outputs, atol=1e-4, rtol=1e-4)
    assert jnp.allclose(last, ref_last, atol=1e-4, rtol=1e-4)

    print("KERNEL_OK")
</pallas_src>

<mosaic_0001>
module attributes {stable_mosaic.version = 11 : i64} {
  func.func @_mtrnn_kernel(%arg0: i32, %arg1: memref<2x32xf32, #tpu.memory_space<vmem>>, %arg2: memref<2x8x16xf32, #tpu.memory_space<vmem>>, %arg3: memref<16x32xf32, #tpu.memory_space<vmem>>, %arg4: memref<32x32xf32, #tpu.memory_space<vmem>>, %arg5: memref<1x32xf32, #tpu.memory_space<vmem>>, %arg6: memref<2x8x32xf32, #tpu.memory_space<vmem>>, %arg7: memref<2x32xf32, #tpu.memory_space<vmem>>) attributes {dimension_semantics = [#tpu.dimension_semantics<arbitrary>], iteration_bounds = array<i64: 1>, scalar_prefetch = 0 : i64, scratch_operands = 1 : i64, tpu.core_type = #tpu.core_type<tc>, window_params = [{pipeline_mode = #tpu.pipeline_mode<synchronous>, transform_indices = @transform_0, window_bounds = array<i64: 2, 32>}, {transform_indices = @transform_1, window_bounds = array<i64: 2, 8, 16>}, {pipeline_mode = #tpu.pipeline_mode<synchronous>, transform_indices = @transform_2, window_bounds = array<i64: 16, 32>}, {pipeline_mode = #tpu.pipeline_mode<synchronous>, transform_indices = @transform_3, window_bounds = array<i64: 32, 32>}, {pipeline_mode = #tpu.pipeline_mode<synchronous>, transform_indices = @transform_4, window_bounds = array<i64: 1, 32>}, {transform_indices = @transform_5, window_bounds = array<i64: 2, 8, 32>}]} {
    %c0_i32 = arith.constant 0 : i32
    %0 = arith.cmpi eq, %arg0, %c0_i32 : i32
    %1 = arith.extui %0 : i1 to i32
    %c0_i32_0 = arith.constant 0 : i32
    %2 = arith.cmpi ne, %1, %c0_i32_0 : i32
    scf.if %2 {
      %c0_82 = arith.constant 0 : index
      %c0_83 = arith.constant 0 : index
      %136 = vector.load %arg1[%c0_82, %c0_83] : memref<2x32xf32, #tpu.memory_space<vmem>>, vector<2x32xf32>
      %c0_84 = arith.constant 0 : index
      %c0_85 = arith.constant 0 : index
      %137 = vector.load %arg7[%c0_84, %c0_85] : memref<2x32xf32, #tpu.memory_space<vmem>>, vector<2x32xf32>
      tpu.vector_store %arg7[%c0_84, %c0_85], %136 {strides = array<i32>} : memref<2x32xf32, #tpu.memory_space<vmem>>, vector<2x32xf32>,
    } else {
    }
    %c0 = arith.constant 0 : index
    %c0_1 = arith.constant 0 : index
    %3 = vector.load %arg3[%c0, %c0_1] : memref<16x32xf32, #tpu.memory_space<vmem>>, vector<16x32xf32>
    %c0_2 = arith.constant 0 : index
    %c0_3 = arith.constant 0 : index
    %4 = vector.load %arg4[%c0_2, %c0_3] : memref<32x32xf32, #tpu.memory_space<vmem>>, vector<32x32xf32>
    %c0_4 = arith.constant 0 : index
    %c0_5 = arith.constant 0 : index
    %5 = vector.load %arg5[%c0_4, %c0_5] : memref<1x32xf32, #tpu.memory_space<vmem>>, vector<1x32xf32>
    %c0_6 = arith.constant 0 : index
    %c0_7 = arith.constant 0 : index
    %6 = vector.load %arg7[%c0_6, %c0_7] : memref<2x32xf32, #tpu.memory_space<vmem>>, vector<2x32xf32>
    %c0_8 = arith.constant 0 : index
    %c0_9 = arith.constant 0 : index
    %c0_10 = arith.constant 0 : index
    %7 = vector.load %arg2[%c0_8, %c0_9, %c0_10] : memref<2x8x16xf32, #tpu.memory_space<vmem>>, vector<2x1x16xf32>
    %8 = vector.shape_cast %7 : vector<2x1x16xf32> to vector<2x16xf32>
    %cst = arith.constant dense<0.000000e+00> : vector<2x32xf32>
    %9 = tpu.matmul %8, %3, %cst {dimension_numbers = #tpu.dot_dimension_numbers<[1], [0], [0], [1], [0, 0, 1, 1], [], []>} : vector<2x16xf32>, vector<16x32xf32>, vector<2x32xf32> -> vector<2x32xf32>
    %cst_11 = arith.constant dense<0.000000e+00> : vector<2x32xf32>
    %10 = tpu.matmul %6, %4, %cst_11 {dimension_numbers = #tpu.dot_dimension_numbers<[1], [0], [0], [1], [0, 0, 1, 1], [], []>} : vector<2x32xf32>, vector<32x32xf32>, vector<2x32xf32> -> vector<2x32xf32>
    %11 = arith.addf %9, %10 : vector<2x32xf32>
    %12 = vector.broadcast %5 : vector<1x32xf32> to vector<2x32xf32>
    %13 = arith.addf %11, %12 : vector<2x32xf32>
    %cst_12 = arith.constant 5.000000e-01 : f32
    %14 = vector.broadcast %cst_12 : f32 to vector<2x32xf32>
    %15 = arith.mulf %14, %6 : vector<2x32xf32>
    %16 = math.tanh %13 : vector<2x32xf32>
    %cst_13 = arith.constant 5.000000e-01 : f32
    %17 = vector.broadcast %cst_13 : f32 to vector<2x32xf32>
    %18 = arith.mulf %17, %16 : vector<2x32xf32>
    %19 = arith.addf %15, %18 : vector<2x32xf32>
    %c0_14 = arith.constant 0 : index
    %c0_15 = arith.constant 0 : index
    %c0_16 = arith.constant 0 : index
    %20 = vector.load %arg6[%c0_14, %c0_15, %c0_16] : memref<2x8x32xf32, #tpu.memory_space<vmem>>, vector<2x1x32xf32>
    %21 = vector.shape_cast %20 : vector<2x1x32xf32> to vector<2x32xf32>
    %22 = vector.shape_cast %19 : vector<2x32xf32> to vector<2x1x32xf32>
    tpu.vector_store %arg6[%c0_14, %c0_15, %c0_16], %22 {strides = array<i32>} : memref<2x8x32xf32, #tpu.memory_space<vmem>>, vector<2x1x32xf32>,
    %c0_17 = arith.constant 0 : index
    %c1 = arith.constant 1 : index
    %c0_18 = arith.constant 0 : index
    %23 = vector.load %arg2[%c0_17, %c1, %c0_18] : memref<2x8x16xf32, #tpu.memory_space<vmem>>, vector<2x1x16xf32>
    %24 = vector.shape_cast %23 : vector<2x1x16xf32> to vector<2x16xf32>
    %cst_19 = arith.constant dense<0.000000e+00> : vector<2x32xf32>
    %25 = tpu.matmul %24, %3, %cst_19 {dimension_numbers = #tpu.dot_dimension_numbers<[1], [0], [0], [1], [0, 0, 1, 1], [], []>} : vector<2x16xf32>, vector<16x32xf32>, vector<2x32xf32> -> vector<2x32xf32>
    %cst_20 = arith.constant dense<0.000000e+00> : vector<2x32xf32>
    %26 = tpu.matmul %19, %4, %cst_20 {dimension_numbers = #tpu.dot_dimension_numbers<[1], [0], [0], [1], [0, 0, 1, 1], [], []>} : vector<2x32xf32>, vector<32x32xf32>, vector<2x32xf32> -> vector<2x32xf32>
    %27 = arith.addf %25, %26 : vector<2x32xf32>
    %28 = vector.broadcast %5 : vector<1x32xf32> to vector<2x32xf32>
    %29 = arith.addf %27, %28 : vector<2x32xf32>
    %cst_21 = arith.constant 5.000000e-01 : f32
    %30 = vector.broadcast %cst_21 : f32 to vector<2x32xf32>
    %31 = arith.mulf %30, %19 : vector<2x32xf32>
    %32 = math.tanh %29 : vector<2x32xf32>
    %cst_22 = arith.constant 5.000000e-01 : f32
    %33 = vector.broadcast %cst_22 : f32 to vector<2x32xf32>
    %34 = arith.mulf %33, %32 : vector<2x32xf32>
    %35 = arith.addf %31, %34 : vector<2x32xf32>
    %c0_23 = arith.constant 0 : index
    %c1_24 = arith.constant 1 : index
    %c0_25 = arith.constant 0 : index
    %36 = vector.load %arg6[%c0_23, %c1_24, %c0_25] : memref<2x8x32xf32, #tpu.memory_space<vmem>>, vector<2x1x32xf32>
    %37 = vector.shape_cast %36 : vector<2x1x32xf32> to vector<2x32xf32>
    %38 = vector.shape_cast %35 : vector<2x32xf32> to vector<2x1x32xf32>
    tpu.vector_store %arg6[%c0_23, %c1_24, %c0_25], %38 {strides = array<i32>} : memref<2x8x32xf32, #tpu.memory_space<vmem>>, vector<2x1x32xf32>,
    %c0_26 = arith.constant 0 : index
    %c2 = arith.constant 2 : index
    %c0_27 = arith.constant 0 : index
    %39 = vector.load %arg2[%c0_26, %c2, %c0_27] : memref<2x8x16xf32, #tpu.memory_space<vmem>>, vector<2x1x16xf32>
    %40 = vector.shape_cast %39 : vector<2x1x16xf32> to vector<2x16xf32>
    %cst_28 = arith.constant dense<0.000000e+00> : vector<2x32xf32>
    %41 = tpu.matmul %40, %3, %cst_28 {dimension_numbers = #tpu.dot_dimension_numbers<[1], [0], [0], [1], [0, 0, 1, 1], [], []>} : vector<2x16xf32>, vector<16x32xf32>, vector<2x32xf32> -> vector<2x32xf32>
    %cst_29 = arith.constant dense<0.000000e+00> : vector<2x32xf32>
    %42 = tpu.matmul %35, %4, %cst_29 {dimension_numbers = #tpu.dot_dimension_numbers<[1], [0], [0], [1], [0, 0, 1, 1], [], []>} : vector<2x32xf32>, vector<32x32xf32>, vector<2x32xf32> -> vector<2x32xf32>
    %43 = arith.addf %41, %42 : vector<2x32xf32>
    %44 = vector.broadcast %5 : vector<1x32xf32> to vector<2x32xf32>
    %45 = arith.addf %43, %44 : vector<2x32xf32>
    %cst_30 = arith.constant 5.000000e-01 : f32
    %46 = vector.broadcast %cst_30 : f32 to vector<2x32xf32>
    %47 = arith.mulf %46, %35 : vector<2x32xf32>
    %48 = math.tanh %45 : vector<2x32xf32>
    %cst_31 = arith.constant 5.000000e-01 : f32
    %49 = vector.broadcast %cst_31 : f32 to vector<2x32xf32>
    %50 = arith.mulf %49, %48 : vector<2x32xf32>
    %51 = arith.addf %47, %50 : vector<2x32xf32>
    %c0_32 = arith.constant 0 : index
    %c2_33 = arith.constant 2 : index
    %c0_34 = arith.constant 0 : index
    %52 = vector.load %arg6[%c0_32, %c2_33, %c0_34] : memref<2x8x32xf32, #tpu.memory_space<vmem>>, vector<2x1x32xf32>
    %53 = vector.shape_cast %52 : vector<2x1x32xf32> to vector<2x32xf32>
    %54 = vector.shape_cast %51 : vector<2x32xf32> to vector<2x1x32xf32>
    tpu.vector_store %arg6[%c0_32, %c2_33, %c0_34], %54 {strides = array<i32>} : memref<2x8x32xf32, #tpu.memory_space<vmem>>, vector<2x1x32xf32>,
    %c0_35 = arith.constant 0 : index
    %c3 = arith.constant 3 : index
    %c0_36 = arith.constant 0 : index
    %55 = vector.load %arg2[%c0_35, %c3, %c0_36] : memref<2x8x16xf32, #tpu.memory_space<vmem>>, vector<2x1x16xf32>
    %56 = vector.shape_cast %55 : vector<2x1x16xf32> to vector<2x16xf32>
    %cst_37 = arith.constant dense<0.000000e+00> : vector<2x32xf32>
    %57 = tpu.matmul %56, %3, %cst_37 {dimension_numbers = #tpu.dot_dimension_numbers<[1], [0], [0], [1], [0, 0, 1, 1], [], []>} : vector<2x16xf32>, vector<16x32xf32>, vector<2x32xf32> -> vector<2x32xf32>
    %cst_38 = arith.constant dense<0.000000e+00> : vector<2x32xf32>
    %58 = tpu.matmul %51, %4, %cst_38 {dimension_numbers = #tpu.dot_dimension_numbers<[1], [0], [0], [1], [0, 0, 1, 1], [], []>} : vector<2x32xf32>, vector<32x32xf32>, vector<2x32xf32> -> vector<2x32xf32>
    %59 = arith.addf %57, %58 : vector<2x32xf32>
    %60 = vector.broadcast %5 : vector<1x32xf32> to vector<2x32xf32>
    %61 = arith.addf %59, %60 : vector<2x32xf32>
    %cst_39 = arith.constant 5.000000e-01 : f32
    %62 = vector.broadcast %cst_39 : f32 to vector<2x32xf32>
    %63 = arith.mulf %62, %51 : vector<2x32xf32>
    %64 = math.tanh %61 : vector<2x32xf32>
    %cst_40 = arith.constant 5.000000e-01 : f32
    %65 = vector.broadcast %cst_40 : f32 to vector<2x32xf32>
    %66 = arith.mulf %65, %64 : vector<2x32xf32>
    %67 = arith.addf %63, %66 : vector<2x32xf32>
    %c0_41 = arith.constant 0 : index
    %c3_42 = arith.constant 3 : index
    %c0_43 = arith.constant 0 : index
    %68 = vector.load %arg6[%c0_41, %c3_42, %c0_43] : memref<2x8x32xf32, #tpu.memory_space<vmem>>, vector<2x1x32xf32>
    %69 = vector.shape_cast %68 : vector<2x1x32xf32> to vector<2x32xf32>
    %70 = vector.shape_cast %67 : vector<2x32xf32> to vector<2x1x32xf32>
    tpu.vector_store %arg6[%c0_41, %c3_42, %c0_43], %70 {strides = array<i32>} : memref<2x8x32xf32, #tpu.memory_space<vmem>>, vector<2x1x32xf32>,
    %c0_44 = arith.constant 0 : index
    %c4 = arith.constant 4 : index
    %c0_45 = arith.constant 0 : index
    %71 = vector.load %arg2[%c0_44, %c4, %c0_45] : memref<2x8x16xf32, #tpu.memory_space<vmem>>, vector<2x1x16xf32>
    %72 = vector.shape_cast %71 : vector<2x1x16xf32> to vector<2x16xf32>
    %cst_46 = arith.constant dense<0.000000e+00> : vector<2x32xf32>
    %73 = tpu.matmul %72, %3, %cst_46 {dimension_numbers = #tpu.dot_dimension_numbers<[1], [0], [0], [1], [0, 0, 1, 1], [], []>} : vector<2x16xf32>, vector<16x32xf32>, vector<2x32xf32> -> vector<2x32xf32>
    %cst_47 = arith.constant dense<0.000000e+00> : vector<2x32xf32>
    %74 = tpu.matmul %67, %4, %cst_47 {dimension_numbers = #tpu.dot_dimension_numbers<[1], [0], [0], [1], [0, 0, 1, 1], [], []>} : vector<2x32xf32>, vector<32x32xf32>, vector<2x32xf32> -> vector<2x32xf32>
    %75 = arith.addf %73, %74 : vector<2x32xf32>
    %76 = vector.broadcast %5 : vector<1x32xf32> to vector<2x32xf32>
    %77 = arith.addf %75, %76 : vector<2x32xf32>
    %cst_48 = arith.constant 5.000000e-01 : f32
    %78 = vector.broadcast %cst_48 : f32 to vector<2x32xf32>
    %79 = arith.mulf %78, %67 : vector<2x32xf32>
    %80 = math.tanh %77 : vector<2x32xf32>
    %cst_49 = arith.constant 5.000000e-01 : f32
    %81 = vector.broadcast %cst_49 : f32 to vector<2x32xf32>
    %82 = arith.mulf %81, %80 : vector<2x32xf32>
    %83 = arith.addf %79, %82 : vector<2x32xf32>
    %c0_50 = arith.constant 0 : index
    %c4_51 = arith.constant 4 : index
    %c0_52 = arith.constant 0 : index
    %84 = vector.load %arg6[%c0_50, %c4_51, %c0_52] : memref<2x8x32xf32, #tpu.memory_space<vmem>>, vector<2x1x32xf32>
    %85 = vector.shape_cast %84 : vector<2x1x32xf32> to vector<2x32xf32>
    %86 = vector.shape_cast %83 : vector<2x32xf32> to vector<2x1x32xf32>
    tpu.vector_store %arg6[%c0_50, %c4_51, %c0_52], %86 {strides = array<i32>} : memref<2x8x32xf32, #tpu.memory_space<vmem>>, vector<2x1x32xf32>,
    %c0_53 = arith.constant 0 : index
    %c5 = arith.constant 5 : index
    %c0_54 = arith.constant 0 : index
    %87 = vector.load %arg2[%c0_53, %c5, %c0_54] : memref<2x8x16xf32, #tpu.memory_space<vmem>>, vector<2x1x16xf32>
    %88 = vector.shape_cast %87 : vector<2x1x16xf32> to vector<2x16xf32>
    %cst_55 = arith.constant dense<0.000000e+00> : vector<2x32xf32>
    %89 = tpu.matmul %88, %3, %cst_55 {dimension_numbers = #tpu.dot_dimension_numbers<[1], [0], [0], [1], [0, 0, 1, 1], [], []>} : vector<2x16xf32>, vector<16x32xf32>, vector<2x32xf32> -> vector<2x32xf32>
    %cst_56 = arith.constant dense<0.000000e+00> : vector<2x32xf32>
    %90 = tpu.matmul %83, %4, %cst_56 {dimension_numbers = #tpu.dot_dimension_numbers<[1], [0], [0], [1], [0, 0, 1, 1], [], []>} : vector<2x32xf32>, vector<32x32xf32>, vector<2x32xf32> -> vector<2x32xf32>
    %91 = arith.addf %89, %90 : vector<2x32xf32>
    %92 = vector.broadcast %5 : vector<1x32xf32> to vector<2x32xf32>
    %93 = arith.addf %91, %92 : vector<2x32xf32>
    %cst_57 = arith.constant 5.000000e-01 : f32
    %94 = vector.broadcast %cst_57 : f32 to vector<2x32xf32>
    %95 = arith.mulf %94, %83 : vector<2x32xf32>
    %96 = math.tanh %93 : vector<2x32xf32>
    %cst_58 = arith.constant 5.000000e-01 : f32
    %97 = vector.broadcast %cst_58 : f32 to vector<2x32xf32>
    %98 = arith.mulf %97, %96 : vector<2x32xf32>
    %99 = arith.addf %95, %98 : vector<2x32xf32>
    %c0_59 = arith.constant 0 : index
    %c5_60 = arith.constant 5 : index
    %c0_61 = arith.constant 0 : index
    %100 = vector.load %arg6[%c0_59, %c5_60, %c0_61] : memref<2x8x32xf32, #tpu.memory_space<vmem>>, vector<2x1x32xf32>
    %101 = vector.shape_cast %100 : vector<2x1x32xf32> to vector<2x32xf32>
    %102 = vector.shape_cast %99 : vector<2x32xf32> to vector<2x1x32xf32>
    tpu.vector_store %arg6[%c0_59, %c5_60, %c0_61], %102 {strides = array<i32>} : memref<2x8x32xf32, #tpu.memory_space<vmem>>, vector<2x1x32xf32>,
    %c0_62 = arith.constant 0 : index
    %c6 = arith.constant 6 : index
    %c0_63 = arith.constant 0 : index
    %103 = vector.load %arg2[%c0_62, %c6, %c0_63] : memref<2x8x16xf32, #tpu.memory_space<vmem>>, vector<2x1x16xf32>
    %104 = vector.shape_cast %103 : vector<2x1x16xf32> to vector<2x16xf32>
    %cst_64 = arith.constant dense<0.000000e+00> : vector<2x32xf32>
    %105 = tpu.matmul %104, %3, %cst_64 {dimension_numbers = #tpu.dot_dimension_numbers<[1], [0], [0], [1], [0, 0, 1, 1], [], []>} : vector<2x16xf32>, vector<16x32xf32>, vector<2x32xf32> -> vector<2x32xf32>
    %cst_65 = arith.constant dense<0.000000e+00> : vector<2x32xf32>
    %106 = tpu.matmul %99, %4, %cst_65 {dimension_numbers = #tpu.dot_dimension_numbers<[1], [0], [0], [1], [0, 0, 1, 1], [], []>} : vector<2x32xf32>, vector<32x32xf32>, vector<2x32xf32> -> vector<2x32xf32>
    %107 = arith.addf %105, %106 : vector<2x32xf32>
    %108 = vector.broadcast %5 : vector<1x32xf32> to vector<2x32xf32>
    %109 = arith.addf %107, %108 : vector<2x32xf32>
    %cst_66 = arith.constant 5.000000e-01 : f32
    %110 = vector.broadcast %cst_66 : f32 to vector<2x32xf32>
    %111 = arith.mulf %110, %99 : vector<2x32xf32>
    %112 = math.tanh %109 : vector<2x32xf32>
    %cst_67 = arith.constant 5.000000e-01 : f32
    %113 = vector.broadcast %cst_67 : f32 to vector<2x32xf32>
    %114 = arith.mulf %113, %112 : vector<2x32xf32>
    %115 = arith.addf %111, %114 : vector<2x32xf32>
    %c0_68 = arith.constant 0 : index
    %c6_69 = arith.constant 6 : index
    %c0_70 = arith.constant 0 : index
    %116 = vector.load %arg6[%c0_68, %c6_69, %c0_70] : memref<2x8x32xf32, #tpu.memory_space<vmem>>, vector<2x1x32xf32>
    %117 = vector.shape_cast %116 : vector<2x1x32xf32> to vector<2x32xf32>
    %118 = vector.shape_cast %115 : vector<2x32xf32> to vector<2x1x32xf32>
    tpu.vector_store %arg6[%c0_68, %c6_69, %c0_70], %118 {strides = array<i32>} : memref<2x8x32xf32, #tpu.memory_space<vmem>>, vector<2x1x32xf32>,
    %c0_71 = arith.constant 0 : index
    %c7 = arith.constant 7 : index
    %c0_72 = arith.constant 0 : index
    %119 = vector.load %arg2[%c0_71, %c7, %c0_72] : memref<2x8x16xf32, #tpu.memory_space<vmem>>, vector<2x1x16xf32>
    %120 = vector.shape_cast %119 : vector<2x1x16xf32> to vector<2x16xf32>
    %cst_73 = arith.constant dense<0.000000e+00> : vector<2x32xf32>
    %121 = tpu.matmul %120, %3, %cst_73 {dimension_numbers = #tpu.dot_dimension_numbers<[1], [0], [0], [1], [0, 0, 1, 1], [], []>} : vector<2x16xf32>, vector<16x32xf32>, vector<2x32xf32> -> vector<2x32xf32>
    %cst_74 = arith.constant dense<0.000000e+00> : vector<2x32xf32>
    %122 = tpu.matmul %115, %4, %cst_74 {dimension_numbers = #tpu.dot_dimension_numbers<[1], [0], [0], [1], [0, 0, 1, 1], [], []>} : vector<2x32xf32>, vector<32x32xf32>, vector<2x32xf32> -> vector<2x32xf32>
    %123 = arith.addf %121, %122 : vector<2x32xf32>
    %124 = vector.broadcast %5 : vector<1x32xf32> to vector<2x32xf32>
    %125 = arith.addf %123, %124 : vector<2x32xf32>
    %cst_75 = arith.constant 5.000000e-01 : f32
    %126 = vector.broadcast %cst_75 : f32 to vector<2x32xf32>
    %127 = arith.mulf %126, %115 : vector<2x32xf32>
    %128 = math.tanh %125 : vector<2x32xf32>
    %cst_76 = arith.constant 5.000000e-01 : f32
    %129 = vector.broadcast %cst_76 : f32 to vector<2x32xf32>
    %130 = arith.mulf %129, %128 : vector<2x32xf32>
    %131 = arith.addf %127, %130 : vector<2x32xf32>
    %c0_77 = arith.constant 0 : index
    %c7_78 = arith.constant 7 : index
    %c0_79 = arith.constant 0 : index
    %132 = vector.load %arg6[%c0_77, %c7_78, %c0_79] : memref<2x8x32xf32, #tpu.memory_space<vmem>>, vector<2x1x32xf32>
    %133 = vector.shape_cast %132 : vector<2x1x32xf32> to vector<2x32xf32>
    %134 = vector.shape_cast %131 : vector<2x32xf32> to vector<2x1x32xf32>
    tpu.vector_store %arg6[%c0_77, %c7_78, %c0_79], %134 {strides = array<i32>} : memref<2x8x32xf32, #tpu.memory_space<vmem>>, vector<2x1x32xf32>,
    %c0_80 = arith.constant 0 : index
    %c0_81 = arith.constant 0 : index
    %135 = vector.load %arg7[%c0_80, %c0_81] : memref<2x32xf32, #tpu.memory_space<vmem>>, vector<2x32xf32>
    tpu.vector_store %arg7[%c0_80, %c0_81], %131 {strides = array<i32>} : memref<2x32xf32, #tpu.memory_space<vmem>>, vector<2x32xf32>,
    return
  }
  func.func @transform_0(%arg0: i32) -> (i32, i32) {
    %c0_i32 = arith.constant 0 : i32
    %c0_i32_0 = arith.constant 0 : i32
    %c0_i32_1 = arith.constant 0 : i32
    return %c0_i32, %c0_i32_0 : i32, i32
  }
  func.func @transform_1(%arg0: i32) -> (i32, i32, i32) {
    %c0_i32 = arith.constant 0 : i32
    %c0_i32_0 = arith.constant 0 : i32
    %c0_i32_1 = arith.constant 0 : i32
    return %c0_i32, %arg0, %c0_i32_0 : i32, i32, i32
  }
  func.func @transform_2(%arg0: i32) -> (i32, i32) {
    %c0_i32 = arith.constant 0 : i32
    %c0_i32_0 = arith.constant 0 : i32
    %c0_i32_1 = arith.constant 0 : i32
    return %c0_i32, %c0_i32_0 : i32, i32
  }
  func.func @transform_3(%arg0: i32) -> (i32, i32) {
    %c0_i32 = arith.constant 0 : i32
    %c0_i32_0 = arith.constant 0 : i32
    %c0_i32_1 = arith.constant 0 : i32
    return %c0_i32, %c0_i32_0 : i32, i32
  }
  func.func @transform_4(%arg0: i32) -> (i32, i32) {
    %c0_i32 = arith.constant 0 : i32
    %c0_i32_0 = arith.constant 0 : i32
    %c0_i32_1 = arith.constant 0 : i32
    return %c0_i32, %c0_i32_0 : i32, i32
  }
  func.func @transform_5(%arg0: i32) -> (i32, i32, i32) {
    %c0_i32 = arith.constant 0 : i32
    %c0_i32_0 = arith.constant 0 : i32
    %c0_i32_1 = arith.constant 0 : i32
    return %c0_i32, %arg0, %c0_i32_0 : i32, i32, i32
  }
}

</mosaic_0001>

<llo_original>
// kernel: mtrnn_forward.1
$region0: #{mtrnn_forward.1}
  #allocation0 [shape = 'u32[]', space=smem, size = 0x4, offset = 0x4, fixed_abs, tag = 'smem constant byte address 0x4 - core index']
  #allocation1 [shape = 'u32[144,128]{1,0:T(1,128)}', space=vmem, size = 0x12000, scoped, tag = 'internal scratch']
  #allocation2 [shape = 'f32[2,32]{1,0:T(2,128)}', space=vmem, size = 0x400, scoped, tag = 'scratch operand']
  %s0 = inlined_call_operand.vmem [shape: f32[2,32], index: 0, kind: input, shape index: {}]
  %s1 = inlined_call_operand.vmem [shape: f32[2,8,16], index: 1, kind: input, shape index: {}]
  %s2 = inlined_call_operand.vmem [shape: f32[16,32], index: 2, kind: input, shape index: {}]
  %s3 = inlined_call_operand.vmem [shape: f32[32,32], index: 3, kind: input, shape index: {}]
  %s4 = inlined_call_operand.vmem [shape: f32[1,32], index: 4, kind: input, shape index: {}]
  %s5 = inlined_call_operand.vmem [shape: f32[2,8,32], index: 5, kind: output, shape index: {}]
  %s6 = sld [smem:[#allocation0]]
  $region34: #{mtrnn_forward.1} parent=0
    _
  %s8 = ssub.s32 1, %s6
  %s9 = scalar_select 0, %s8, %s6
  // Predicated region
  $region2: #{mtrnn_forward.1} parent=0 // pred_check
    _
  $region3: #{mtrnn_forward.1} parent=0 // pred_check_branch
    %11 = sbr.rel (0) target = $region5
  $region4: #{mtrnn_forward.1} parent=0 // pred_region
    _
  $region5: #{mtrnn_forward.1} parent=0 // pred_fallthru
    _
  // Predicated region
  $region6: #{mtrnn_forward.1} parent=0 // pred_check
    _
  $region7: #{mtrnn_forward.1} parent=0 // pred_check_branch
    %13 = sbr.rel (0) target = $region9
  $region8: #{mtrnn_forward.1} parent=0 // pred_region
    _
  $region9: #{mtrnn_forward.1} parent=0 // pred_fallthru
    _
  // Predicated region
  $region10: #{mtrnn_forward.1} parent=0 // pred_check
    _
  $region11: #{mtrnn_forward.1} parent=0 // pred_check_branch
    %15 = sbr.rel (0) target = $region13
  $region12: #{mtrnn_forward.1} parent=0 // pred_region
    _
  $region13: #{mtrnn_forward.1} parent=0 // pred_fallthru
    _
  // Predicated region
  $region14: #{mtrnn_forward.1} parent=0 // pred_check
    _
  $region15: #{mtrnn_forward.1} parent=0 // pred_check_branch
    %17 = sbr.rel (0) target = $region17
  $region16: #{mtrnn_forward.1} parent=0 // pred_region
    _
  $region17: #{mtrnn_forward.1} parent=0 // pred_fallthru
    _
  // Predicated region
  $region18: #{mtrnn_forward.1} parent=0 // pred_check
    _
  $region19: #{mtrnn_forward.1} parent=0 // pred_check_branch
    %19 = sbr.rel (0) target = $region21
  $region20: #{mtrnn_forward.1} parent=0 // pred_region
    _
  $region21: #{mtrnn_forward.1} parent=0 // pred_fallthru
    _
  %p20 = scmp.eq.s32.totalorder 0, 0
  // Predicated region
  $region22: #{mtrnn_forward.1} parent=0 // pred_check
    %p21 = pneg %p20
  $region23: #{mtrnn_forward.1} parent=0 // pred_check_branch
    %23 = sbr.rel (%p21) target = $region25
  $region24: #{mtrnn_forward.1} parent=0 // pred_region
    %v24 = vld [vmem:[%s0] sm:$0x3]
    %vm25 = vcmask 254976
    %26 = vst.msk [vmem:[#allocation2] sm:$0x3] %vm25, %v24
  $region25: #{mtrnn_forward.1} parent=0 // pred_fallthru
    _
  %v27 = vld [vmem:[%s2] sm:$0xff]
  %v28 = vld [vmem:[%s2 + $0x8] sm:$0xff]
  %v29 = vld [vmem:[%s3] sm:$0xff]
  %v30 = vld [vmem:[%s3 + $0x8] sm:$0xff]
  %v31 = vld [vmem:[%s3 + $0x10] sm:$0xff]
  %v32 = vld [vmem:[%s3 + $0x18] sm:$0xff]
  %v33 = vld [vmem:[%s4] sm:$0x1]
  %v34 = vld [vmem:[#allocation2] sm:$0x3]
  %v35 = vld [vmem:[%s1] sm:$0x1]
  %v36 = vld [vmem:[%s1 + $0x8] sm:$0x1]
  %vm37 = vcmask 261120
  %v39 = vsel %vm37, %v34, 0
  %41 = vmatprep.subr.mxu0 0.0
  %42 = vmatpush1.msra.mxu0 %v29
  %43 = vmatprep.subr.mxu0 0.0
  %44 = vmatpush1.msra.mxu0 %v30
  %45 = vmatprep.subr.mxu0 0.0
  %46 = vmatpush1.msra.mxu0 %v31
  %47 = vmatprep.subr.mxu0 0.0
  %48 = vmatpush1.msra.mxu0 %v32
  %49 = vmatprep.subr.mxu0 0.0
  %50 = vmatpush1.msra.mxu0 0.0
  %51 = vmatprep.subr.mxu0 0.0
  %52 = vmatpush1.msra.mxu0 0.0
  %53 = vmatprep.subr.mxu0 0.0
  %54 = vmatpush1.msra.mxu0 0.0
  %55 = vmatprep.subr.mxu0 0.0
  %56 = vmatpush1.msra.mxu0 0.0
  %57 = vmatprep.subr.mxu0 0.0
  %58 = vmatpush1.msra.mxu0 0.0
  %59 = vmatprep.subr.mxu0 0.0
  %60 = vmatpush1.msra.mxu0 0.0
  %61 = vmatprep.subr.mxu0 0.0
  %62 = vmatpush1.msra.mxu0 0.0
  %63 = vmatprep.subr.mxu0 0.0
  %64 = vmatpush1.msra.mxu0 0.0
  %65 = vmatprep.subr.mxu0 0.0
  %66 = vmatpush1.msra.mxu0 0.0
  %67 = vmatprep.subr.mxu0 0.0
  %68 = vmatpush1.msra.mxu0 0.0
  %69 = vmatprep.subr.mxu0 0.0
  %70 = vmatpush1.msra.mxu0 0.0
  %71 = vmatprep.subr.mxu0 0.0
  %72 = vmatpush1.msra.mxu0 0.0
  %73 = vmatprep.subr.mxu0 0.0
  %74 = vmatpush1.msra.mxu0 0.0
  %75 = vmatprep.subr.mxu0 0.0
  %76 = vmatpush1.msra.mxu0 0.0
  %77 = vmatprep.subr.mxu0 0.0
  %78 = vmatpush1.msra.mxu0 0.0
  %79 = vmatprep.subr.mxu0 0.0
  %80 = vmatpush1.msra.mxu0 0.0
  %81 = vmatprep.subr.mxu0 0.0
  %82 = vmatpush1.msra.mxu0 0.0
  %83 = vmatprep.subr.mxu0 0.0
  %84 = vmatpush1.msra.mxu0 0.0
  %85 = vmatprep.subr.mxu0 0.0
  %86 = vmatpush1.msra.mxu0 0.0
  %87 = vmatprep.subr.mxu0 0.0
  %88 = vmatpush1.msra.mxu0 0.0
  %89 = vmatprep.subr.mxu0 0.0
  %90 = vmatpush1.msra.mxu0 0.0
  %91 = vmatprep.subr.mxu0 0.0
  %92 = vmatpush1.msra.mxu0 0.0
  %93 = vmatprep.subr.mxu0 0.0
  %94 = vmatpush1.msra.mxu0 0.0
  %95 = vmatprep.subr.mxu0 0.0
  %96 = vmatpush1.msra.mxu0 0.0
  %97 = vmatprep.subr.mxu0 0.0
  %98 = vmatpush1.msra.mxu0 0.0
  %99 = vmatprep.subr.mxu0 0.0
  %100 = vmatpush1.msra.mxu0 0.0
  %101 = vmatprep.subr.mxu0 0.0
  %102 = vmatpush1.msra.mxu0 0.0
  %103 = vmatprep.subr.mxu0 0.0
  %104 = vmatpush1.msra.mxu0 0.0
  %105 = vmatprep.mubr.f32.mxu0 0.0
  %106 = vmatmul.mubr.f32.gmra.mrb[0].mxu0 %v39
  %v107 = vpop.f32.mrb[0].mxu0
  %v108 = vadd.f32 0.0, %v107
  %v109 = vpop.f32.mrb[0].mxu0
  %110 = vdwg.mxu0
  %v113 = vrot.slane %v36, 7
  %vm114 = vcmask 1041409
  %v115 = vsel %vm114, %v113, %v35
  %vm116 = vcmask 130048
  %v117 = vsel %vm116, %v115, 0
  %119 = vmatprep.subr.mxu0 0.0
  %120 = vmatpush1.msra.mxu0 %v27
  %121 = vmatprep.subr.mxu0 0.0
  %122 = vmatpush1.msra.mxu0 %v28
  %123 = vmatprep.subr.mxu0 0.0
  %124 = vmatpush1.msra.mxu0 0.0
  %125 = vmatprep.subr.mxu0 0.0
  %126 = vmatpush1.msra.mxu0 0.0
  %127 = vmatprep.subr.mxu0 0.0
  %128 = vmatpush1.msra.mxu0 0.0
  %129 = vmatprep.subr.mxu0 0.0
  %130 = vmatpush1.msra.mxu0 0.0
  %131 = vmatprep.subr.mxu0 0.0
  %132 = vmatpush1.msra.mxu0 0.0
  %133 = vmatprep.subr.mxu0 0.0
  %134 = vmatpush1.msra.mxu0 0.0
  %135 = vmatprep.subr.mxu0 0.0
  %136 = vmatpush1.msra.mxu0 0.0
  %137 = vmatprep.subr.mxu0 0.0
  %138 = vmatpush1.msra.mxu0 0.0
  %139 = vmatprep.subr.mxu0 0.0
  %140 = vmatpush1.msra.mxu0 0.0
  %141 = vmatprep.subr.mxu0 0.0
  %142 = vmatpush1.msra.mxu0 0.0
  %143 = vmatprep.subr.mxu0 0.0
  %144 = vmatpush1.msra.mxu0 0.0
  %145 = vmatprep.subr.mxu0 0.0
  %146 = vmatpush1.msra.mxu0 0.0
  %147 = vmatprep.subr.mxu0 0.0
  %148 = vmatpush1.msra.mxu0 0.0
  %149 = vmatprep.subr.mxu0 0.0
  %150 = vmatpush1.msra.mxu0 0.0
  %151 = vmatprep.subr.mxu0 0.0
  %152 = vmatpush1.msra.mxu0 0.0
  %153 = vmatprep.subr.mxu0 0.0
  %154 = vmatpush1.msra.mxu0 0.0
  %155 = vmatprep.subr.mxu0 0.0
  %156 = vmatpush1.msra.mxu0 0.0
  %157 = vmatprep.subr.mxu0 0.0
  %158 = vmatpush1.msra.mxu0 0.0
  %159 = vmatprep.subr.mxu0 0.0
  %160 = vmatpush1.msra.mxu0 0.0
  %161 = vmatprep.subr.mxu0 0.0
  %162 = vmatpush1.msra.mxu0 0.0
  %163 = vmatprep.subr.mxu0 0.0
  %164 = vmatpush1.msra.mxu0 0.0
  %165 = vmatprep.subr.mxu0 0.0
  %166 = vmatpush1.msra.mxu0 0.0
  %167 = vmatprep.subr.mxu0 0.0
  %168 = vmatpush1.msra.mxu0 0.0
  %169 = vmatprep.subr.mxu0 0.0
  %170 = vmatpush1.msra.mxu0 0.0
  %171 = vmatprep.subr.mxu0 0.0
  %172 = vmatpush1.msra.mxu0 0.0
  %173 = vmatprep.subr.mxu0 0.0
  %174 = vmatpush1.msra.mxu0 0.0
  %175 = vmatprep.subr.mxu0 0.0
  %176 = vmatpush1.msra.mxu0 0.0
  %177 = vmatprep.subr.mxu0 0.0
  %178 = vmatpush1.msra.mxu0 0.0
  %179 = vmatprep.subr.mxu0 0.0
  %180 = vmatpush1.msra.mxu0 0.0
  %181 = vmatprep.subr.mxu0 0.0
  %182 = vmatpush1.msra.mxu0 0.0
  %183 = vmatprep.mubr.f32.mxu0 0.0
  %184 = vmatmul.mubr.f32.gmra.mrb[0].mxu0 %v117
  %v185 = vpop.f32.mrb[0].mxu0
  %v186 = vadd.f32 %v108, %v185
  %v187 = vpop.f32.mrb[0].mxu0
  %188 = vdwg.mxu0
  %v190 = vlaneseq
  %v191 = vshrl.u32 %v190, 7
  %v192 = vsub.s32 0, %v191
  %v193 = vrot.slane %v33, %v192
  %v195 = vadd.f32 %v186, %v193
  %v196 = vmul.f32 %v34, 0.5
  %v197 = vtanh.pop %v195
  %v198 = vmul.f32 %v197, 0.5
  %v199 = vadd.f32 %v196, %v198
  %v202 = vunpack.c.l.s4 1966171168
  %v203 = vunpack.c.0.s8 %v202
  %v204 = vlaneseq
  %v205 = vshrl.u32 %v204, 7
  %v206 = vsub.s32 %v203, %v205
  %v207 = vrot.slane %v199, %v206
  %v208 = vcombine.high %v207, %v207
  %v210 = vunpack.c.l.s4 1966171168
  %v211 = vunpack.c.0.s8 %v210
  %v212 = vlaneseq
  %v213 = vshrl.u32 %v212, 7
  %v214 = vsub.s32 %v211, %v213
  %v215 = vrot.slane %v207, %v214
  %v217 = vunpack.c.l.s4 1966171168
  %v218 = vunpack.c.0.s8 %v217
  %v219 = vlaneseq
  %v220 = vshrl.u32 %v219, 7
  %v221 = vsub.s32 %v218, %v220
  %v222 = vrot.slane %v208, %v221
  %vm225 = vcmask 253952
  %226 = vst.msk [vmem:[%s5] sm:$0x1] %vm225, %v215
  %227 = vst.msk [vmem:[%s5 + $0x8] sm:$0x1] %vm225, %v222
  %v228 = vld [vmem:[%s1 + $0x1] sm:$0x1]
  %v229 = vld [vmem:[%s1 + $0x9] sm:$0x1]
  %v230 = vsel %vm37, %v199, 0
  %232 = vmatprep.subr.mxu0 0.0
  %233 = vmatpush1.msra.mxu0 %v29
  %234 = vmatprep.subr.mxu0 0.0
  %235 = vmatpush1.msra.mxu0 %v30
  %236 = vmatprep.subr.mxu0 0.0
  %237 = vmatpush1.msra.mxu0 %v31
  %238 = vmatprep.subr.mxu0 0.0
  %239 = vmatpush1.msra.mxu0 %v32
  %240 = vmatprep.subr.mxu0 0.0
  %241 = vmatpush1.msra.mxu0 0.0
  %242 = vmatprep.subr.mxu0 0.0
  %243 = vmatpush1.msra.mxu0 0.0
  %244 = vmatprep.subr.mxu0 0.0
  %245 = vmatpush1.msra.mxu0 0.0
  %246 = vmatprep.subr.mxu0 0.0
  %247 = vmatpush1.msra.mxu0 0.0
  %248 = vmatprep.subr.mxu0 0.0
  %249 = vmatpush1.msra.mxu0 0.0
  %250 = vmatprep.subr.mxu0 0.0
  %251 = vmatpush1.msra.mxu0 0.0
  %252 = vmatprep.subr.mxu0 0.0
  %253 = vmatpush1.msra.mxu0 0.0
  %254 = vmatprep.subr.mxu0 0.0
  %255 = vmatpush1.msra.mxu0 0.0
  %256 = vmatprep.subr.mxu0 0.0
  %257 = vmatpush1.msra.mxu0 0.0
  %258 = vmatprep.subr.mxu0 0.0
  %259 = vmatpush1.msra.mxu0 0.0
  %260 = vmatprep.subr.mxu0 0.0
  %261 = vmatpush1.msra.mxu0 0.0
  %262 = vmatprep.subr.mxu0 0.0
  %263 = vmatpush1.msra.mxu0 0.0
  %264 = vmatprep.subr.mxu0 0.0
  %265 = vmatpush1.msra.mxu0 0.0
  %266 = vmatprep.subr.mxu0 0.0
  %267 = vmatpush1.msra.mxu0 0.0
  %268 = vmatprep.subr.mxu0 0.0
  %269 = vmatpush1.msra.mxu0 0.0
  %270 = vmatprep.subr.mxu0 0.0
  %271 = vmatpush1.msra.mxu0 0.0
  %272 = vmatprep.subr.mxu0 0.0
  %273 = vmatpush1.msra.mxu0 0.0
  %274 = vmatprep.subr.mxu0 0.0
  %275 = vmatpush1.msra.mxu0 0.0
  %276 = vmatprep.subr.mxu0 0.0
  %277 = vmatpush1.msra.mxu0 0.0
  %278 = vmatprep.subr.mxu0 0.0
  %279 = vmatpush1.msra.mxu0 0.0
  %280 = vmatprep.subr.mxu0 0.0
  %281 = vmatpush1.msra.mxu0 0.0
  %282 = vmatprep.subr.mxu0 0.0
  %283 = vmatpush1.msra.mxu0 0.0
  %284 = vmatprep.subr.mxu0 0.0
  %285 = vmatpush1.msra.mxu0 0.0
  %286 = vmatprep.subr.mxu0 0.0
  %287 = vmatpush1.msra.mxu0 0.0
  %288 = vmatprep.subr.mxu0 0.0
  %289 = vmatpush1.msra.mxu0 0.0
  %290 = vmatprep.subr.mxu0 0.0
  %291 = vmatpush1.msra.mxu0 0.0
  %292 = vmatprep.subr.mxu0 0.0
  %293 = vmatpush1.msra.mxu0 0.0
  %294 = vmatprep.subr.mxu0 0.0
  %295 = vmatpush1.msra.mxu0 0.0
  %296 = vmatprep.mubr.f32.mxu0 0.0
  %297 = vmatmul.mubr.f32.gmra.mrb[0].mxu0 %v230
  %v298 = vpop.f32.mrb[0].mxu0
  %v299 = vadd.f32 0.0, %v298
  %v300 = vpop.f32.mrb[0].mxu0
  %301 = vdwg.mxu0
  %v304 = vrot.slane %v229, 7
  %v305 = vsel %vm114, %v304, %v228
  %v306 = vsel %vm116, %v305, 0
  %308 = vmatprep.subr.mxu0 0.0
  %309 = vmatpush1.msra.mxu0 %v27
  %310 = vmatprep.subr.mxu0 0.0
  %311 = vmatpush1.msra.mxu0 %v28
  %312 = vmatprep.subr.mxu0 0.0
  %313 = vmatpush1.msra.mxu0 0.0
  %314 = vmatprep.subr.mxu0 0.0
  %315 = vmatpush1.msra.mxu0 0.0
  %316 = vmatprep.subr.mxu0 0.0
  %317 = vmatpush1.msra.mxu0 0.0
  %318 = vmatprep.subr.mxu0 0.0
  %319 = vmatpush1.msra.mxu0 0.0
  %320 = vmatprep.subr.mxu0 0.0
  %321 = vmatpush1.msra.mxu0 0.0
  %322 = vmatprep.subr.mxu0 0.0
  %323 = vmatpush1.msra.mxu0 0.0
  %324 = vmatprep.subr.mxu0 0.0
  %325 = vmatpush1.msra.mxu0 0.0
  %326 = vmatprep.subr.mxu0 0.0
  %327 = vmatpush1.msra.mxu0 0.0
  %328 = vmatprep.subr.mxu0 0.0
  %329 = vmatpush1.msra.mxu0 0.0
  %330 = vmatprep.subr.mxu0 0.0
  %331 = vmatpush1.msra.mxu0 0.0
  %332 = vmatprep.subr.mxu0 0.0
  %333 = vmatpush1.msra.mxu0 0.0
  %334 = vmatprep.subr.mxu0 0.0
  %335 = vmatpush1.msra.mxu0 0.0
  %336 = vmatprep.subr.mxu0 0.0
  %337 = vmatpush1.msra.mxu0 0.0
  %338 = vmatprep.subr.mxu0 0.0
  %339 = vmatpush1.msra.mxu0 0.0
  %340 = vmatprep.subr.mxu0 0.0
  %341 = vmatpush1.msra.mxu0 0.0
  %342 = vmatprep.subr.mxu0 0.0
  %343 = vmatpush1.msra.mxu0 0.0
  %344 = vmatprep.subr.mxu0 0.0
  %345 = vmatpush1.msra.mxu0 0.0
  %346 = vmatprep.subr.mxu0 0.0
  %347 = vmatpush1.msra.mxu0 0.0
  %348 = vmatprep.subr.mxu0 0.0
  %349 = vmatpush1.msra.mxu0 0.0
  %350 = vmatprep.subr.mxu0 0.0
  %351 = vmatpush1.msra.mxu0 0.0
  %352 = vmatprep.subr.mxu0 0.0
  %353 = vmatpush1.msra.mxu0 0.0
  %354 = vmatprep.subr.mxu0 0.0
  %355 = vmatpush1.msra.mxu0 0.0
  %356 = vmatprep.subr.mxu0 0.0
  %357 = vmatpush1.msra.mxu0 0.0
  %358 = vmatprep.subr.mxu0 0.0
  %359 = vmatpush1.msra.mxu0 0.0
  %360 = vmatprep.subr.mxu0 0.0
  %361 = vmatpush1.msra.mxu0 0.0
  %362 = vmatprep.subr.mxu0 0.0
  %363 = vmatpush1.msra.mxu0 0.0
  %364 = vmatprep.subr.mxu0 0.0
  %365 = vmatpush1.msra.mxu0 0.0
  %366 = vmatprep.subr.mxu0 0.0
  %367 = vmatpush1.msra.mxu0 0.0
  %368 = vmatprep.subr.mxu0 0.0
  %369 = vmatpush1.msra.mxu0 0.0
  %370 = vmatprep.subr.mxu0 0.0
  %371 = vmatpush1.msra.mxu0 0.0
  %372 = vmatprep.mubr.f32.mxu0 0.0
  %373 = vmatmul.mubr.f32.gmra.mrb[0].mxu0 %v306
  %v374 = vpop.f32.mrb[0].mxu0
  %v375 = vadd.f32 %v299, %v374
  %v376 = vpop.f32.mrb[0].mxu0
  %377 = vdwg.mxu0
  %v378 = vadd.f32 %v375, %v193
  %v379 = vmul.f32 %v199, 0.5
  %v380 = vtanh.pop %v378
  %v381 = vmul.f32 %v380, 0.5
  %v382 = vadd.f32 %v379, %v381
  %v385 = vunpack.c.l.s4 1966171168
  %v386 = vunpack.c.0.s8 %v385
  %v387 = vlaneseq
  %v388 = vshrl.u32 %v387, 7
  %v389 = vsub.s32 %v386, %v388
  %v390 = vrot.slane %v382, %v389
  %v391 = vcombine.high %v390, %v390
  %v393 = vunpack.c.l.s4 1966171168
  %v394 = vunpack.c.0.s8 %v393
  %v395 = vlaneseq
  %v396 = vshrl.u32 %v395, 7
  %v397 = vsub.s32 %v394, %v396
  %v398 = vrot.slane %v390, %v397
  %v400 = vunpack.c.l.s4 1966171168
  %v401 = vunpack.c.0.s8 %v400
  %v402 = vlaneseq
  %v403 = vshrl.u32 %v402, 7
  %v404 = vsub.s32 %v401, %v403
  %v405 = vrot.slane %v391, %v404
  %408 = vst.msk [vmem:[%s5 + $0x1] sm:$0x1] %vm225, %v398
  %409 = vst.msk [vmem:[%s5 + $0x9] sm:$0x1] %vm225, %v405
  %v410 = vld [vmem:[%s1 + $0x2] sm:$0x1]
  %v411 = vld [vmem:[%s1 + $0xa] sm:$0x1]
  %v412 = vsel %vm37, %v382, 0
  %414 = vmatprep.subr.mxu0 0.0
  %415 = vmatpush1.msra.mxu0 %v29
  %416 = vmatprep.subr.mxu0 0.0
  %417 = vmatpush1.msra.mxu0 %v30
  %418 = vmatprep.subr.mxu0 0.0
  %419 = vmatpush1.msra.mxu0 %v31
  %420 = vmatprep.subr.mxu0 0.0
  %421 = vmatpush1.msra.mxu0 %v32
  %422 = vmatprep.subr.mxu0 0.0
  %423 = vmatpush1.msra.mxu0 0.0
  %424 = vmatprep.subr.mxu0 0.0
  %425 = vmatpush1.msra.mxu0 0.0
  %426 = vmatprep.subr.mxu0 0.0
  %427 = vmatpush1.msra.mxu0 0.0
  %428 = vmatprep.subr.mxu0 0.0
  %429 = vmatpush1.msra.mxu0 0.0
  %430 = vmatprep.subr.mxu0 0.0
  %431 = vmatpush1.msra.mxu0 0.0
  %432 = vmatprep.subr.mxu0 0.0
  %433 = vmatpush1.msra.mxu0 0.0
  %434 = vmatprep.subr.mxu0 0.0
  %435 = vmatpush1.msra.mxu0 0.0
  %436 = vmatprep.subr.mxu0 0.0
  %437 = vmatpush1.msra.mxu0 0.0
  %438 = vmatprep.subr.mxu0 0.0
  %439 = vmatpush1.msra.mxu0 0.0
  %440 = vmatprep.subr.mxu0 0.0
  %441 = vmatpush1.msra.mxu0 0.0
  %442 = vmatprep.subr.mxu0 0.0
  %443 = vmatpush1.msra.mxu0 0.0
  %444 = vmatprep.subr.mxu0 0.0
  %445 = vmatpush1.msra.mxu0 0.0
  %446 = vmatprep.subr.mxu0 0.0
  %447 = vmatpush1.msra.mxu0 0.0
  %448 = vmatprep.subr.mxu0 0.0
  %449 = vmatpush1.msra.mxu0 0.0
  %450 = vmatprep.subr.mxu0 0.0
  %451 = vmatpush1.msra.mxu0 0.0
  %452 = vmatprep.subr.mxu0 0.0
  %453 = vmatpush1.msra.mxu0 0.0
  %454 = vmatprep.subr.mxu0 0.0
  %455 = vmatpush1.msra.mxu0 0.0
  %456 = vmatprep.subr.mxu0 0.0
  %457 = vmatpush1.msra.mxu0 0.0
  %458 = vmatprep.subr.mxu0 0.0
  %459 = vmatpush1.msra.mxu0 0.0
  %460 = vmatprep.subr.mxu0 0.0
  %461 = vmatpush1.msra.mxu0 0.0
  %462 = vmatprep.subr.mxu0 0.0
  %463 = vmatpush1.msra.mxu0 0.0
  %464 = vmatprep.subr.mxu0 0.0
  %465 = vmatpush1.msra.mxu0 0.0
  %466 = vmatprep.subr.mxu0 0.0
  %467 = vmatpush1.msra.mxu0 0.0
  %468 = vmatprep.subr.mxu0 0.0
  %469 = vmatpush1.msra.mxu0 0.0
  %470 = vmatprep.subr.mxu0 0.0
  %471 = vmatpush1.msra.mxu0 0.0
  %472 = vmatprep.subr.mxu0 0.0
  %473 = vmatpush1.msra.mxu0 0.0
  %474 = vmatprep.subr.mxu0 0.0
  %475 = vmatpush1.msra.mxu0 0.0
  %476 = vmatprep.subr.mxu0 0.0
  %477 = vmatpush1.msra.mxu0 0.0
  %478 = vmatprep.mubr.f32.mxu0 0.0
  %479 = vmatmul.mubr.f32.gmra.mrb[0].mxu0 %v412
  %v480 = vpop.f32.mrb[0].mxu0
  %v481 = vadd.f32 0.0, %v480
  %v482 = vpop.f32.mrb[0].mxu0
  %483 = vdwg.mxu0
  %v486 = vrot.slane %v411, 7
  %v487 = vsel %vm114, %v486, %v410
  %v488 = vsel %vm116, %v487, 0
  %490 = vmatprep.subr.mxu0 0.0
  %491 = vmatpush1.msra.mxu0 %v27
  %492 = vmatprep.subr.mxu0 0.0
  %493 = vmatpush1.msra.mxu0 %v28
  %494 = vmatprep.subr.mxu0 0.0
  %495 = vmatpush1.msra.mxu0 0.0
  %496 = vmatprep.subr.mxu0 0.0
  %497 = vmatpush1.msra.mxu0 0.0
  %498 = vmatprep.subr.mxu0 0.0
  %499 = vmatpush1.msra.mxu0 0.0
  %500 = vmatprep.subr.mxu0 0.0
  %501 = vmatpush1.msra.mxu0 0.0
  %502 = vmatprep.subr.mxu0 0.0
  %503 = vmatpush1.msra.mxu0 0.0
  %504 = vmatprep.subr.mxu0 0.0
  %505 = vmatpush1.msra.mxu0 0.0
  %506 = vmatprep.subr.mxu0 0.0
  %507 = vmatpush1.msra.mxu0 0.0
  %508 = vmatprep.subr.mxu0 0.0
  %509 = vmatpush1.msra.mxu0 0.0
  %510 = vmatprep.subr.mxu0 0.0
  %511 = vmatpush1.msra.mxu0 0.0
  %512 = vmatprep.subr.mxu0 0.0
  %513 = vmatpush1.msra.mxu0 0.0
  %514 = vmatprep.subr.mxu0 0.0
  %515 = vmatpush1.msra.mxu0 0.0
  %516 = vmatprep.subr.mxu0 0.0
  %517 = vmatpush1.msra.mxu0 0.0
  %518 = vmatprep.subr.mxu0 0.0
  %519 = vmatpush1.msra.mxu0 0.0
  %520 = vmatprep.subr.mxu0 0.0
  %521 = vmatpush1.msra.mxu0 0.0
  %522 = vmatprep.subr.mxu0 0.0
  %523 = vmatpush1.msra.mxu0 0.0
  %524 = vmatprep.subr.mxu0 0.0
  %525 = vmatpush1.msra.mxu0 0.0
  %526 = vmatprep.subr.mxu0 0.0
  %527 = vmatpush1.msra.mxu0 0.0
  %528 = vmatprep.subr.mxu0 0.0
  %529 = vmatpush1.msra.mxu0 0.0
  %530 = vmatprep.subr.mxu0 0.0
  %531 = vmatpush1.msra.mxu0 0.0
  %532 = vmatprep.subr.mxu0 0.0
  %533 = vmatpush1.msra.mxu0 0.0
  %534 = vmatprep.subr.mxu0 0.0
  %535 = vmatpush1.msra.mxu0 0.0
  %536 = vmatprep.subr.mxu0 0.0
  %537 = vmatpush1.msra.mxu0 0.0
  %538 = vmatprep.subr.mxu0 0.0
  %539 = vmatpush1.msra.mxu0 0.0
  %540 = vmatprep.subr.mxu0 0.0
  %541 = vmatpush1.msra.mxu0 0.0
  %542 = vmatprep.subr.mxu0 0.0
  %543 = vmatpush1.msra.mxu0 0.0
  %544 = vmatprep.subr.mxu0 0.0
  %545 = vmatpush1.msra.mxu0 0.0
  %546 = vmatprep.subr.mxu0 0.0
  %547 = vmatpush1.msra.mxu0 0.0
  %548 = vmatprep.subr.mxu0 0.0
  %549 = vmatpush1.msra.mxu0 0.0
  %550 = vmatprep.subr.mxu0 0.0
  %551 = vmatpush1.msra.mxu0 0.0
  %552 = vmatprep.subr.mxu0 0.0
  %553 = vmatpush1.msra.mxu0 0.0
  %554 = vmatprep.mubr.f32.mxu0 0.0
  %555 = vmatmul.mubr.f32.gmra.mrb[0].mxu0 %v488
  %v556 = vpop.f32.mrb[0].mxu0
  %v557 = vadd.f32 %v481, %v556
  %v558 = vpop.f32.mrb[0].mxu0
  %559 = vdwg.mxu0
  %v560 = vadd.f32 %v557, %v193
  %v561 = vmul.f32 %v382, 0.5
  %v562 = vtanh.pop %v560
  %v563 = vmul.f32 %v562, 0.5
  %v564 = vadd.f32 %v561, %v563
  %v567 = vunpack.c.l.s4 1966171168
  %v568 = vunpack.c.0.s8 %v567
  %v569 = vlaneseq
  %v570 = vshrl.u32 %v569, 7
  %v571 = vsub.s32 %v568, %v570
  %v572 = vrot.slane %v564, %v571
  %v573 = vcombine.high %v572, %v572
  %v575 = vunpack.c.l.s4 1966171168
  %v576 = vunpack.c.0.s8 %v575
  %v577 = vlaneseq
  %v578 = vshrl.u32 %v577, 7
  %v579 = vsub.s32 %v576, %v578
  %v580 = vrot.slane %v572, %v579
  %v582 = vunpack.c.l.s4 1966171168
  %v583 = vunpack.c.0.s8 %v582
  %v584 = vlaneseq
  %v585 = vshrl.u32 %v584, 7
  %v586 = vsub.s32 %v583, %v585
  %v587 = vrot.slane %v573, %v586
  %590 = vst.msk [vmem:[%s5 + $0x2] sm:$0x1] %vm225, %v580
  %591 = vst.msk [vmem:[%s5 + $0xa] sm:$0x1] %vm225, %v587
  %v592 = vld [vmem:[%s1 + $0x3] sm:$0x1]
  %v593 = vld [vmem:[%s1 + $0xb] sm:$0x1]
  %v594 = vsel %vm37, %v564, 0
  %596 = vmatprep.subr.mxu0 0.0
  %597 = vmatpush1.msra.mxu0 %v29
  %598 = vmatprep.subr.mxu0 0.0
  %599 = vmatpush1.msra.mxu0 %v30
  %600 = vmatprep.subr.mxu0 0.0
  %601 = vmatpush1.msra.mxu0 %v31
  %602 = vmatprep.subr.mxu0 0.0
  %603 = vmatpush1.msra.mxu0 %v32
  %604 = vmatprep.subr.mxu0 0.0
  %605 = vmatpush1.msra.mxu0 0.0
  %606 = vmatprep.subr.mxu0 0.0
  %607 = vmatpush1.msra.mxu0 0.0
  %608 = vmatprep.subr.mxu0 0.0
  %609 = vmatpush1.msra.mxu0 0.0
  %610 = vmatprep.subr.mxu0 0.0
  %611 = vmatpush1.msra.mxu0 0.0
  %612 = vmatprep.subr.mxu0 0.0
  %613 = vmatpush1.msra.mxu0 0.0
  %614 = vmatprep.subr.mxu0 0.0
  %615 = vmatpush1.msra.mxu0 0.0
  %616 = vmatprep.subr.mxu0 0.0
  %617 = vmatpush1.msra.mxu0 0.0
  %618 = vmatprep.subr.mxu0 0.0
  %619 = vmatpush1.msra.mxu0 0.0
  %620 = vmatprep.subr.mxu0 0.0
  %621 = vmatpush1.msra.mxu0 0.0
  %622 = vmatprep.subr.mxu0 0.0
  %623 = vmatpush1.msra.mxu0 0.0
  %624 = vmatprep.subr.mxu0 0.0
  %625 = vmatpush1.msra.mxu0 0.0
  %626 = vmatprep.subr.mxu0 0.0
  %627 = vmatpush1.msra.mxu0 0.0
  %628 = vmatprep.subr.mxu0 0.0
  %629 = vmatpush1.msra.mxu0 0.0
  %630 = vmatprep.subr.mxu0 0.0
  %631 = vmatpush1.msra.mxu0 0.0
  %632 = vmatprep.subr.mxu0 0.0
  %633 = vmatpush1.msra.mxu0 0.0
  %634 = vmatprep.subr.mxu0 0.0
  %635 = vmatpush1.msra.mxu0 0.0
  %636 = vmatprep.subr.mxu0 0.0
  %637 = vmatpush1.msra.mxu0 0.0
  %638 = vmatprep.subr.mxu0 0.0
  %639 = vmatpush1.msra.mxu0 0.0
  %640 = vmatprep.subr.mxu0 0.0
  %641 = vmatpush1.msra.mxu0 0.0
  %642 = vmatprep.subr.mxu0 0.0
  %643 = vmatpush1.msra.mxu0 0.0
  %644 = vmatprep.subr.mxu0 0.0
  %645 = vmatpush1.msra.mxu0 0.0
  %646 = vmatprep.subr.mxu0 0.0
  %647 = vmatpush1.msra.mxu0 0.0
  %648 = vmatprep.subr.mxu0 0.0
  %649 = vmatpush1.msra.mxu0 0.0
  %650 = vmatprep.subr.mxu0 0.0
  %651 = vmatpush1.msra.mxu0 0.0
  %652 = vmatprep.subr.mxu0 0.0
  %653 = vmatpush1.msra.mxu0 0.0
  %654 = vmatprep.subr.mxu0 0.0
  %655 = vmatpush1.msra.mxu0 0.0
  %656 = vmatprep.subr.mxu0 0.0
  %657 = vmatpush1.msra.mxu0 0.0
  %658 = vmatprep.subr.mxu0 0.0
  %659 = vmatpush1.msra.mxu0 0.0
  %660 = vmatprep.mubr.f32.mxu0 0.0
  %661 = vmatmul.mubr.f32.gmra.mrb[0].mxu0 %v594
  %v662 = vpop.f32.mrb[0].mxu0
  %v663 = vadd.f32 0.0, %v662
  %v664 = vpop.f32.mrb[0].mxu0
  %665 = vdwg.mxu0
  %v668 = vrot.slane %v593, 7
  %v669 = vsel %vm114, %v668, %v592
  %v670 = vsel %vm116, %v669, 0
  %672 = vmatprep.subr.mxu0 0.0
  %673 = vmatpush1.msra.mxu0 %v27
  %674 = vmatprep.subr.mxu0 0.0
  %675 = vmatpush1.msra.mxu0 %v28
  %676 = vmatprep.subr.mxu0 0.0
  %677 = vmatpush1.msra.mxu0 0.0
  %678 = vmatprep.subr.mxu0 0.0
  %679 = vmatpush1.msra.mxu0 0.0
  %680 = vmatprep.subr.mxu0 0.0
  %681 = vmatpush1.msra.mxu0 0.0
  %682 = vmatprep.subr.mxu0 0.0
  %683 = vmatpush1.msra.mxu0 0.0
  %684 = vmatprep.subr.mxu0 0.0
  %685 = vmatpush1.msra.mxu0 0.0
  %686 = vmatprep.subr.mxu0 0.0
  %687 = vmatpush1.msra.mxu0 0.0
  %688 = vmatprep.subr.mxu0 0.0
  %689 = vmatpush1.msra.mxu0 0.0
  %690 = vmatprep.subr.mxu0 0.0
  %691 = vmatpush1.msra.mxu0 0.0
  %692 = vmatprep.subr.mxu0 0.0
  %693 = vmatpush1.msra.mxu0 0.0
  %694 = vmatprep.subr.mxu0 0.0
  %695 = vmatpush1.msra.mxu0 0.0
  %696 = vmatprep.subr.mxu0 0.0
  %697 = vmatpush1.msra.mxu0 0.0
  %698 = vmatprep.subr.mxu0 0.0
  %699 = vmatpush1.msra.mxu0 0.0
  %700 = vmatprep.subr.mxu0 0.0
  %701 = vmatpush1.msra.mxu0 0.0
  %702 = vmatprep.subr.mxu0 0.0
  %703 = vmatpush1.msra.mxu0 0.0
  %704 = vmatprep.subr.mxu0 0.0
  %705 = vmatpush1.msra.mxu0 0.0
  %706 = vmatprep.subr.mxu0 0.0
  %707 = vmatpush1.msra.mxu0 0.0
  %708 = vmatprep.subr.mxu0 0.0
  %709 = vmatpush1.msra.mxu0 0.0
  %710 = vmatprep.subr.mxu0 0.0
  %711 = vmatpush1.msra.mxu0 0.0
  %712 = vmatprep.subr.mxu0 0.0
  %713 = vmatpush1.msra.mxu0 0.0
  %714 = vmatprep.subr.mxu0 0.0
  %715 = vmatpush1.msra.mxu0 0.0
  %716 = vmatprep.subr.mxu0 0.0
  %717 = vmatpush1.msra.mxu0 0.0
  %718 = vmatprep.subr.mxu0 0.0
  %719 = vmatpush1.msra.mxu0 0.0
  %720 = vmatprep.subr.mxu0 0.0
  %721 = vmatpush1.msra.mxu0 0.0
  %722 = vmatprep.subr.mxu0 0.0
  %723 = vmatpush1.msra.mxu0 0.0
  %724 = vmatprep.subr.mxu0 0.0
  %725 = vmatpush1.msra.mxu0 0.0
  %726 = vmatprep.subr.mxu0 0.0
  %727 = vmatpush1.msra.mxu0 0.0
  %728 = vmatprep.subr.mxu0 0.0
  %729 = vmatpush1.msra.mxu0 0.0
  %730 = vmatprep.subr.mxu0 0.0
  %731 = vmatpush1.msra.mxu0 0.0
  %732 = vmatprep.subr.mxu0 0.0
  %733 = vmatpush1.msra.mxu0 0.0
  %734 = vmatprep.subr.mxu0 0.0
  %735 = vmatpush1.msra.mxu0 0.0
  %736 = vmatprep.mubr.f32.mxu0 0.0
  %737 = vmatmul.mubr.f32.gmra.mrb[0].mxu0 %v670
  %v738 = vpop.f32.mrb[0].mxu0
  %v739 = vadd.f32 %v663, %v738
  %v740 = vpop.f32.mrb[0].mxu0
  %741 = vdwg.mxu0
  %v742 = vadd.f32 %v739, %v193
  %v743 = vmul.f32 %v564, 0.5
  %v744 = vtanh.pop %v742
  %v745 = vmul.f32 %v744, 0.5
  %v746 = vadd.f32 %v743, %v745
  %v749 = vunpack.c.l.s4 1966171168
  %v750 = vunpack.c.0.s8 %v749
  %v751 = vlaneseq
  %v752 = vshrl.u32 %v751, 7
  %v753 = vsub.s32 %v750, %v752
  %v754 = vrot.slane %v746, %v753
  %v755 = vcombine.high %v754, %v754
  %v757 = vunpack.c.l.s4 1966171168
  %v758 = vunpack.c.0.s8 %v757
  %v759 = vlaneseq
  %v760 = vshrl.u32 %v759, 7
  %v761 = vsub.s32 %v758, %v760
  %v762 = vrot.slane %v754, %v761
  %v764 = vunpack.c.l.s4 1966171168
  %v765 = vunpack.c.0.s8 %v764
  %v766 = vlaneseq
  %v767 = vshrl.u32 %v766, 7
  %v768 = vsub.s32 %v765, %v767
  %v769 = vrot.slane %v755, %v768
  %772 = vst.msk [vmem:[%s5 + $0x3] sm:$0x1] %vm225, %v762
  %773 = vst.msk [vmem:[%s5 + $0xb] sm:$0x1] %vm225, %v769
  %v774 = vld [vmem:[%s1 + $0x4] sm:$0x1]
  %v775 = vld [vmem:[%s1 + $0xc] sm:$0x1]
  %v776 = vsel %vm37, %v746, 0
  %778 = vmatprep.subr.mxu0 0.0
  %779 = vmatpush1.msra.mxu0 %v29
  %780 = vmatprep.subr.mxu0 0.0
  %781 = vmatpush1.msra.mxu0 %v30
  %782 = vmatprep.subr.mxu0 0.0
  %783 = vmatpush1.msra.mxu0 %v31
  %784 = vmatprep.subr.mxu0 0.0
  %785 = vmatpush1.msra.mxu0 %v32
  %786 = vmatprep.subr.mxu0 0.0
  %787 = vmatpush1.msra.mxu0 0.0
  %788 = vmatprep.subr.mxu0 0.0
  %789 = vmatpush1.msra.mxu0 0.0
  %790 = vmatprep.subr.mxu0 0.0
  %791 = vmatpush1.msra.mxu0 0.0
  %792 = vmatprep.subr.mxu0 0.0
  %793 = vmatpush1.msra.mxu0 0.0
  %794 = vmatprep.subr.mxu0 0.0
  %795 = vmatpush1.msra.mxu0 0.0
  %796 = vmatprep.subr.mxu0 0.0
  %797 = vmatpush1.msra.mxu0 0.0
  %798 = vmatprep.subr.mxu0 0.0
  %799 = vmatpush1.msra.mxu0 0.0
  %800 = vmatprep.subr.mxu0 0.0
  %801 = vmatpush1.msra.mxu0 0.0
  %802 = vmatprep.subr.mxu0 0.0
  %803 = vmatpush1.msra.mxu0 0.0
  %804 = vmatprep.subr.mxu0 0.0
  %805 = vmatpush1.msra.mxu0 0.0
  %806 = vmatprep.subr.mxu0 0.0
  %807 = vmatpush1.msra.mxu0 0.0
  %808 = vmatprep.subr.mxu0 0.0
  %809 = vmatpush1.msra.mxu0 0.0
  %810 = vmatprep.subr.mxu0 0.0
  %811 = vmatpush1.msra.mxu0 0.0
  %812 = vmatprep.subr.mxu0 0.0
  %813 = vmatpush1.msra.mxu0 0.0
  %814 = vmatprep.subr.mxu0 0.0
  %815 = vmatpush1.msra.mxu0 0.0
  %816 = vmatprep.subr.mxu0 0.0
  %817 = vmatpush1.msra.mxu0 0.0
  %818 = vmatprep.subr.mxu0 0.0
  %819 = vmatpush1.msra.mxu0 0.0
  %820 = vmatprep.subr.mxu0 0.0
  %821 = vmatpush1.msra.mxu0 0.0
  %822 = vmatprep.subr.mxu0 0.0
  %823 = vmatpush1.msra.mxu0 0.0
  %824 = vmatprep.subr.mxu0 0.0
  %825 = vmatpush1.msra.mxu0 0.0
  %826 = vmatprep.subr.mxu0 0.0
  %827 = vmatpush1.msra.mxu0 0.0
  %828 = vmatprep.subr.mxu0 0.0
  %829 = vmatpush1.msra.mxu0 0.0
  %830 = vmatprep.subr.mxu0 0.0
  %831 = vmatpush1.msra.mxu0 0.0
  %832 = vmatprep.subr.mxu0 0.0
  %833 = vmatpush1.msra.mxu0 0.0
  %834 = vmatprep.subr.mxu0 0.0
  %835 = vmatpush1.msra.mxu0 0.0
  %836 = vmatprep.subr.mxu0 0.0
  %837 = vmatpush1.msra.mxu0 0.0
  %838 = vmatprep.subr.mxu0 0.0
  %839 = vmatpush1.msra.mxu0 0.0
  %840 = vmatprep.subr.mxu0 0.0
  %841 = vmatpush1.msra.mxu0 0.0
  %842 = vmatprep.mubr.f32.mxu0 0.0
  %843 = vmatmul.mubr.f32.gmra.mrb[0].mxu0 %v776
  %v844 = vpop.f32.mrb[0].mxu0
  %v845 = vadd.f32 0.0, %v844
  %v846 = vpop.f32.mrb[0].mxu0
  %847 = vdwg.mxu0
  %v850 = vrot.slane %v775, 7
  %v851 = vsel %vm114, %v850, %v774
  %v852 = vsel %vm116, %v851, 0
  %854 = vmatprep.subr.mxu0 0.0
  %855 = vmatpush1.msra.mxu0 %v27
  %856 = vmatprep.subr.mxu0 0.0
  %857 = vmatpush1.msra.mxu0 %v28
  %858 = vmatprep.subr.mxu0 0.0
  %859 = vmatpush1.msra.mxu0 0.0
  %860 = vmatprep.subr.mxu0 0.0
  %861 = vmatpush1.msra.mxu0 0.0
  %862 = vmatprep.subr.mxu0 0.0
  %863 = vmatpush1.msra.mxu0 0.0
  %864 = vmatprep.subr.mxu0 0.0
  %865 = vmatpush1.msra.mxu0 0.0
  %866 = vmatprep.subr.mxu0 0.0
  %867 = vmatpush1.msra.mxu0 0.0
  %868 = vmatprep.subr.mxu0 0.0
  %869 = vmatpush1.msra.mxu0 0.0
  %870 = vmatprep.subr.mxu0 0.0
  %871 = vmatpush1.msra.mxu0 0.0
  %872 = vmatprep.subr.mxu0 0.0
  %873 = vmatpush1.msra.mxu0 0.0
  %874 = vmatprep.subr.mxu0 0.0
  %875 = vmatpush1.msra.mxu0 0.0
  %876 = vmatprep.subr.mxu0 0.0
  %877 = vmatpush1.msra.mxu0 0.0
  %878 = vmatprep.subr.mxu0 0.0
  %879 = vmatpush1.msra.mxu0 0.0
  %880 = vmatprep.subr.mxu0 0.0
  %881 = vmatpush1.msra.mxu0 0.0
  %882 = vmatprep.subr.mxu0 0.0
  %883 = vmatpush1.msra.mxu0 0.0
  %884 = vmatprep.subr.mxu0 0.0
  %885 = vmatpush1.msra.mxu0 0.0
  %886 = vmatprep.subr.mxu0 0.0
  %887 = vmatpush1.msra.mxu0 0.0
  %888 = vmatprep.subr.mxu0 0.0
  %889 = vmatpush1.msra.mxu0 0.0
  %890 = vmatprep.subr.mxu0 0.0
  %891 = vmatpush1.msra.mxu0 0.0
  %892 = vmatprep.subr.mxu0 0.0
  %893 = vmatpush1.msra.mxu0 0.0
  %894 = vmatprep.subr.mxu0 0.0
  %895 = vmatpush1.msra.mxu0 0.0
  %896 = vmatprep.subr.mxu0 0.0
  %897 = vmatpush1.msra.mxu0 0.0
  %898 = vmatprep.subr.mxu0 0.0
  %899 = vmatpush1.msra.mxu0 0.0
  %900 = vmatprep.subr.mxu0 0.0
  %901 = vmatpush1.msra.mxu0 0.0
  %902 = vmatprep.subr.mxu0 0.0
  %903 = vmatpush1.msra.mxu0 0.0
  %904 = vmatprep.subr.mxu0 0.0
  %905 = vmatpush1.msra.mxu0 0.0
  %906 = vmatprep.subr.mxu0 0.0
  %907 = vmatpush1.msra.mxu0 0.0
  %908 = vmatprep.subr.mxu0 0.0
  %909 = vmatpush1.msra.mxu0 0.0
  %910 = vmatprep.subr.mxu0 0.0
  %911 = vmatpush1.msra.mxu0 0.0
  %912 = vmatprep.subr.mxu0 0.0
  %913 = vmatpush1.msra.mxu0 0.0
  %914 = vmatprep.subr.mxu0 0.0
  %915 = vmatpush1.msra.mxu0 0.0
  %916 = vmatprep.subr.mxu0 0.0
  %917 = vmatpush1.msra.mxu0 0.0
  %918 = vmatprep.mubr.f32.mxu0 0.0
  %919 = vmatmul.mubr.f32.gmra.mrb[0].mxu0 %v852
  %v920 = vpop.f32.mrb[0].mxu0
  %v921 = vadd.f32 %v845, %v920
  %v922 = vpop.f32.mrb[0].mxu0
  %923 = vdwg.mxu0
  %v924 = vadd.f32 %v921, %v193
  %v925 = vmul.f32 %v746, 0.5
  %v926 = vtanh.pop %v924
  %v927 = vmul.f32 %v926, 0.5
  %v928 = vadd.f32 %v925, %v927
  %v931 = vunpack.c.l.s4 1966171168
  %v932 = vunpack.c.0.s8 %v931
  %v933 = vlaneseq
  %v934 = vshrl.u32 %v933, 7
  %v935 = vsub.s32 %v932, %v934
  %v936 = vrot.slane %v928, %v935
  %v937 = vcombine.high %v936, %v936
  %v939 = vunpack.c.l.s4 1966171168
  %v940 = vunpack.c.0.s8 %v939
  %v941 = vlaneseq
  %v942 = vshrl.u32 %v941, 7
  %v943 = vsub.s32 %v940, %v942
  %v944 = vrot.slane %v936, %v943
  %v946 = vunpack.c.l.s4 1966171168
  %v947 = vunpack.c.0.s8 %v946
  %v948 = vlaneseq
  %v949 = vshrl.u32 %v948, 7
  %v950 = vsub.s32 %v947, %v949
  %v951 = vrot.slane %v937, %v950
  %954 = vst.msk [vmem:[%s5 + $0x4] sm:$0x1] %vm225, %v944
  %955 = vst.msk [vmem:[%s5 + $0xc] sm:$0x1] %vm225, %v951
  %v956 = vld [vmem:[%s1 + $0x5] sm:$0x1]
  %v957 = vld [vmem:[%s1 + $0xd] sm:$0x1]
  %v958 = vsel %vm37, %v928, 0
  %960 = vmatprep.subr.mxu0 0.0
  %961 = vmatpush1.msra.mxu0 %v29
  %962 = vmatprep.subr.mxu0 0.0
  %963 = vmatpush1.msra.mxu0 %v30
  %964 = vmatprep.subr.mxu0 0.0
  %965 = vmatpush1.msra.mxu0 %v31
  %966 = vmatprep.subr.mxu0 0.0
  %967 = vmatpush1.msra.mxu0 %v32
  %968 = vmatprep.subr.mxu0 0.0
  %969 = vmatpush1.msra.mxu0 0.0
  %970 = vmatprep.subr.mxu0 0.0
  %971 = vmatpush1.msra.mxu0 0.0
  %972 = vmatprep.subr.mxu0 0.0
  %973 = vmatpush1.msra.mxu0 0.0
  %974 = vmatprep.subr.mxu0 0.0
  %975 = vmatpush1.msra.mxu0 0.0
  %976 = vmatprep.subr.mxu0 0.0
  %977 = vmatpush1.msra.mxu0 0.0
  %978 = vmatprep.subr.mxu0 0.0
  %979 = vmatpush1.msra.mxu0 0.0
  %980 = vmatprep.subr.mxu0 0.0
  %981 = vmatpush1.msra.mxu0 0.0
  %982 = vmatprep.subr.mxu0 0.0
  %983 = vmatpush1.msra.mxu0 0.0
  %984 = vmatprep.subr.mxu0 0.0
  %985 = vmatpush1.msra.mxu0 0.0
  %986 = vmatprep.subr.mxu0 0.0
  %987 = vmatpush1.msra.mxu0 0.0
  %988 = vmatprep.subr.mxu0 0.0
  %989 = vmatpush1.msra.mxu0 0.0
  %990 = vmatprep.subr.mxu0 0.0
  %991 = vmatpush1.msra.mxu0 0.0
  %992 = vmatprep.subr.mxu0 0.0
  %993 = vmatpush1.msra.mxu0 0.0
  %994 = vmatprep.subr.mxu0 0.0
  %995 = vmatpush1.msra.mxu0 0.0
  %996 = vmatprep.subr.mxu0 0.0
  %997 = vmatpush1.msra.mxu0 0.0
  %998 = vmatprep.subr.mxu0 0.0
  %999 = vmatpush1.msra.mxu0 0.0
  %1000 = vmatprep.subr.mxu0 0.0
  %1001 = vmatpush1.msra.mxu0 0.0
  %1002 = vmatprep.subr.mxu0 0.0
  %1003 = vmatpush1.msra.mxu0 0.0
  %1004 = vmatprep.subr.mxu0 0.0
  %1005 = vmatpush1.msra.mxu0 0.0
  %1006 = vmatprep.subr.mxu0 0.0
  %1007 = vmatpush1.msra.mxu0 0.0
  %1008 = vmatprep.subr.mxu0 0.0
  %1009 = vmatpush1.msra.mxu0 0.0
  %1010 = vmatprep.subr.mxu0 0.0
  %1011 = vmatpush1.msra.mxu0 0.0
  %1012 = vmatprep.subr.mxu0 0.0
  %1013 = vmatpush1.msra.mxu0 0.0
  %1014 = vmatprep.subr.mxu0 0.0
  %1015 = vmatpush1.msra.mxu0 0.0
  %1016 = vmatprep.subr.mxu0 0.0
  %1017 = vmatpush1.msra.mxu0 0.0
  %1018 = vmatprep.subr.mxu0 0.0
  %1019 = vmatpush1.msra.mxu0 0.0
  %1020 = vmatprep.subr.mxu0 0.0
  %1021 = vmatpush1.msra.mxu0 0.0
  %1022 = vmatprep.subr.mxu0 0.0
  %1023 = vmatpush1.msra.mxu0 0.0
  %1024 = vmatprep.mubr.f32.mxu0 0.0
  %1025 = vmatmul.mubr.f32.gmra.mrb[0].mxu0 %v958
  %v1026 = vpop.f32.mrb[0].mxu0
  %v1027 = vadd.f32 0.0, %v1026
  %v1028 = vpop.f32.mrb[0].mxu0
  %1029 = vdwg.mxu0
  %v1032 = vrot.slane %v957, 7
  %v1033 = vsel %vm114, %v1032, %v956
  %v1034 = vsel %vm116, %v1033, 0
  %1036 = vmatprep.subr.mxu0 0.0
  %1037 = vmatpush1.msra.mxu0 %v27
  %1038 = vmatprep.subr.mxu0 0.0
  %1039 = vmatpush1.msra.mxu0 %v28
  %1040 = vmatprep.subr.mxu0 0.0
  %1041 = vmatpush1.msra.mxu0 0.0
  %1042 = vmatprep.subr.mxu0 0.0
  %1043 = vmatpush1.msra.mxu0 0.0
  %1044 = vmatprep.subr.mxu0 0.0
  %1045 = vmatpush1.msra.mxu0 0.0
  %1046 = vmatprep.subr.mxu0 0.0
  %1047 = vmatpush1.msra.mxu0 0.0
  %1048 = vmatprep.subr.mxu0 0.0
  %1049 = vmatpush1.msra.mxu0 0.0
  %1050 = vmatprep.subr.mxu0 0.0
  %1051 = vmatpush1.msra.mxu0 0.0
  %1052 = vmatprep.subr.mxu0 0.0
  %1053 = vmatpush1.msra.mxu0 0.0
  %1054 = vmatprep.subr.mxu0 0.0
  %1055 = vmatpush1.msra.mxu0 0.0
  %1056 = vmatprep.subr.mxu0 0.0
  %1057 = vmatpush1.msra.mxu0 0.0
  %1058 = vmatprep.subr.mxu0 0.0
  %1059 = vmatpush1.msra.mxu0 0.0
  %1060 = vmatprep.subr.mxu0 0.0
  %1061 = vmatpush1.msra.mxu0 0.0
  %1062 = vmatprep.subr.mxu0 0.0
  %1063 = vmatpush1.msra.mxu0 0.0
  %1064 = vmatprep.subr.mxu0 0.0
  %1065 = vmatpush1.msra.mxu0 0.0
  %1066 = vmatprep.subr.mxu0 0.0
  %1067 = vmatpush1.msra.mxu0 0.0
  %1068 = vmatprep.subr.mxu0 0.0
  %1069 = vmatpush1.msra.mxu0 0.0
  %1070 = vmatprep.subr.mxu0 0.0
  %1071 = vmatpush1.msra.mxu0 0.0
  %1072 = vmatprep.subr.mxu0 0.0
  %1073 = vmatpush1.msra.mxu0 0.0
  %1074 = vmatprep.subr.mxu0 0.0
  %1075 = vmatpush1.msra.mxu0 0.0
  %1076 = vmatprep.subr.mxu0 0.0
  %1077 = vmatpush1.msra.mxu0 0.0
  %1078 = vmatprep.subr.mxu0 0.0
  %1079 = vmatpush1.msra.mxu0 0.0
  %1080 = vmatprep.subr.mxu0 0.0
  %1081 = vmatpush1.msra.mxu0 0.0
  %1082 = vmatprep.subr.mxu0 0.0
  %1083 = vmatpush1.msra.mxu0 0.0
  %1084 = vmatprep.subr.mxu0 0.0
  %1085 = vmatpush1.msra.mxu0 0.0
  %1086 = vmatprep.subr.mxu0 0.0
  %1087 = vmatpush1.msra.mxu0 0.0
  %1088 = vmatprep.subr.mxu0 0.0
  %1089 = vmatpush1.msra.mxu0 0.0
  %1090 = vmatprep.subr.mxu0 0.0
  %1091 = vmatpush1.msra.mxu0 0.0
  %1092 = vmatprep.subr.mxu0 0.0
  %1093 = vmatpush1.msra.mxu0 0.0
  %1094 = vmatprep.subr.mxu0 0.0
  %1095 = vmatpush1.msra.mxu0 0.0
  %1096 = vmatprep.subr.mxu0 0.0
  %1097 = vmatpush1.msra.mxu0 0.0
  %1098 = vmatprep.subr.mxu0 0.0
  %1099 = vmatpush1.msra.mxu0 0.0
  %1100 = vmatprep.mubr.f32.mxu0 0.0
  %1101 = vmatmul.mubr.f32.gmra.mrb[0].mxu0 %v1034
  %v1102 = vpop.f32.mrb[0].mxu0
  %v1103 = vadd.f32 %v1027, %v1102
  %v1104 = vpop.f32.mrb[0].mxu0
  %1105 = vdwg.mxu0
  %v1106 = vadd.f32 %v1103, %v193
  %v1107 = vmul.f32 %v928, 0.5
  %v1108 = vtanh.pop %v1106
  %v1109 = vmul.f32 %v1108, 0.5
  %v1110 = vadd.f32 %v1107, %v1109
  %v1113 = vunpack.c.l.s4 1966171168
  %v1114 = vunpack.c.0.s8 %v1113
  %v1115 = vlaneseq
  %v1116 = vshrl.u32 %v1115, 7
  %v1117 = vsub.s32 %v1114, %v1116
  %v1118 = vrot.slane %v1110, %v1117
  %v1119 = vcombine.high %v1118, %v1118
  %v1121 = vunpack.c.l.s4 1966171168
  %v1122 = vunpack.c.0.s8 %v1121
  %v1123 = vlaneseq
  %v1124 = vshrl.u32 %v1123, 7
  %v1125 = vsub.s32 %v1122, %v1124
  %v1126 = vrot.slane %v1118, %v1125
  %v1128 = vunpack.c.l.s4 1966171168
  %v1129 = vunpack.c.0.s8 %v1128
  %v1130 = vlaneseq
  %v1131 = vshrl.u32 %v1130, 7
  %v1132 = vsub.s32 %v1129, %v1131
  %v1133 = vrot.slane %v1119, %v1132
  %1136 = vst.msk [vmem:[%s5 + $0x5] sm:$0x1] %vm225, %v1126
  %1137 = vst.msk [vmem:[%s5 + $0xd] sm:$0x1] %vm225, %v1133
  %v1138 = vld [vmem:[%s1 + $0x6] sm:$0x1]
  %v1139 = vld [vmem:[%s1 + $0xe] sm:$0x1]
  %v1140 = vsel %vm37, %v1110, 0
  %1142 = vmatprep.subr.mxu0 0.0
  %1143 = vmatpush1.msra.mxu0 %v29
  %1144 = vmatprep.subr.mxu0 0.0
  %1145 = vmatpush1.msra.mxu0 %v30
  %1146 = vmatprep.subr.mxu0 0.0
  %1147 = vmatpush1.msra.mxu0 %v31
  %1148 = vmatprep.subr.mxu0 0.0
  %1149 = vmatpush1.msra.mxu0 %v32
  %1150 = vmatprep.subr.mxu0 0.0
  %1151 = vmatpush1.msra.mxu0 0.0
  %1152 = vmatprep.subr.mxu0 0.0
  %1153 = vmatpush1.msra.mxu0 0.0
  %1154 = vmatprep.subr.mxu0 0.0
  %1155 = vmatpush1.msra.mxu0 0.0
  %1156 = vmatprep.subr.mxu0 0.0
  %1157 = vmatpush1.msra.mxu0 0.0
  %1158 = vmatprep.subr.mxu0 0.0
  %1159 = vmatpush1.msra.mxu0 0.0
  %1160 = vmatprep.subr.mxu0 0.0
  %1161 = vmatpush1.msra.mxu0 0.0
  %1162 = vmatprep.subr.mxu0 0.0
  %1163 = vmatpush1.msra.mxu0 0.0
  %1164 = vmatprep.subr.mxu0 0.0
  %1165 = vmatpush1.msra.mxu0 0.0
  %1166 = vmatprep.subr.mxu0 0.0
  %1167 = vmatpush1.msra.mxu0 0.0
  %1168 = vmatprep.subr.mxu0 0.0
  %1169 = vmatpush1.msra.mxu0 0.0
  %1170 = vmatprep.subr.mxu0 0.0
  %1171 = vmatpush1.msra.mxu0 0.0
  %1172 = vmatprep.subr.mxu0 0.0
  %1173 = vmatpush1.msra.mxu0 0.0
  %1174 = vmatprep.subr.mxu0 0.0
  %1175 = vmatpush1.msra.mxu0 0.0
  %1176 = vmatprep.subr.mxu0 0.0
  %1177 = vmatpush1.msra.mxu0 0.0
  %1178 = vmatprep.subr.mxu0 0.0
  %1179 = vmatpush1.msra.mxu0 0.0
  %1180 = vmatprep.subr.mxu0 0.0
  %1181 = vmatpush1.msra.mxu0 0.0
  %1182 = vmatprep.subr.mxu0 0.0
  %1183 = vmatpush1.msra.mxu0 0.0
  %1184 = vmatprep.subr.mxu0 0.0
  %1185 = vmatpush1.msra.mxu0 0.0
  %1186 = vmatprep.subr.mxu0 0.0
  %1187 = vmatpush1.msra.mxu0 0.0
  %1188 = vmatprep.subr.mxu0 0.0
  %1189 = vmatpush1.msra.mxu0 0.0
  %1190 = vmatprep.subr.mxu0 0.0
  %1191 = vmatpush1.msra.mxu0 0.0
  %1192 = vmatprep.subr.mxu0 0.0
  %1193 = vmatpush1.msra.mxu0 0.0
  %1194 = vmatprep.subr.mxu0 0.0
  %1195 = vmatpush1.msra.mxu0 0.0
  %1196 = vmatprep.subr.mxu0 0.0
  %1197 = vmatpush1.msra.mxu0 0.0
  %1198 = vmatprep.subr.mxu0 0.0
  %1199 = vmatpush1.msra.mxu0 0.0
  %1200 = vmatprep.subr.mxu0 0.0
  %1201 = vmatpush1.msra.mxu0 0.0
  %1202 = vmatprep.subr.mxu0 0.0
  %1203 = vmatpush1.msra.mxu0 0.0
  %1204 = vmatprep.subr.mxu0 0.0
  %1205 = vmatpush1.msra.mxu0 0.0
  %1206 = vmatprep.mubr.f32.mxu0 0.0
  %1207 = vmatmul.mubr.f32.gmra.mrb[0].mxu0 %v1140
  %v1208 = vpop.f32.mrb[0].mxu0
  %v1209 = vadd.f32 0.0, %v1208
  %v1210 = vpop.f32.mrb[0].mxu0
  %1211 = vdwg.mxu0
  %v1214 = vrot.slane %v1139, 7
  %v1215 = vsel %vm114, %v1214, %v1138
  %v1216 = vsel %vm116, %v1215, 0
  %1218 = vmatprep.subr.mxu0 0.0
  %1219 = vmatpush1.msra.mxu0 %v27
  %1220 = vmatprep.subr.mxu0 0.0
  %1221 = vmatpush1.msra.mxu0 %v28
  %1222 = vmatprep.subr.mxu0 0.0
  %1223 = vmatpush1.msra.mxu0 0.0
  %1224 = vmatprep.subr.mxu0 0.0
  %1225 = vmatpush1.msra.mxu0 0.0
  %1226 = vmatprep.subr.mxu0 0.0
  %1227 = vmatpush1.msra.mxu0 0.0
  %1228 = vmatprep.subr.mxu0 0.0
  %1229 = vmatpush1.msra.mxu0 0.0
  %1230 = vmatprep.subr.mxu0 0.0
  %1231 = vmatpush1.msra.mxu0 0.0
  %1232 = vmatprep.subr.mxu0 0.0
  %1233 = vmatpush1.msra.mxu0 0.0
  %1234 = vmatprep.subr.mxu0 0.0
  %1235 = vmatpush1.msra.mxu0 0.0
  %1236 = vmatprep.subr.mxu0 0.0
  %1237 = vmatpush1.msra.mxu0 0.0
  %1238 = vmatprep.subr.mxu0 0.0
  %1239 = vmatpush1.msra.mxu0 0.0
  %1240 = vmatprep.subr.mxu0 0.0
  %1241 = vmatpush1.msra.mxu0 0.0
  %1242 = vmatprep.subr.mxu0 0.0
  %1243 = vmatpush1.msra.mxu0 0.0
  %1244 = vmatprep.subr.mxu0 0.0
  %1245 = vmatpush1.msra.mxu0 0.0
  %1246 = vmatprep.subr.mxu0 0.0
  %1247 = vmatpush1.msra.mxu0 0.0
  %1248 = vmatprep.subr.mxu0 0.0
  %1249 = vmatpush1.msra.mxu0 0.0
  %1250 = vmatprep.subr.mxu0 0.0
  %1251 = vmatpush1.msra.mxu0 0.0
  %1252 = vmatprep.subr.mxu0 0.0
  %1253 = vmatpush1.msra.mxu0 0.0
  %1254 = vmatprep.subr.mxu0 0.0
  %1255 = vmatpush1.msra.mxu0 0.0
  %1256 = vmatprep.subr.mxu0 0.0
  %1257 = vmatpush1.msra.mxu0 0.0
  %1258 = vmatprep.subr.mxu0 0.0
  %1259 = vmatpush1.msra.mxu0 0.0
  %1260 = vmatprep.subr.mxu0 0.0
  %1261 = vmatpush1.msra.mxu0 0.0
  %1262 = vmatprep.subr.mxu0 0.0
  %1263 = vmatpush1.msra.mxu0 0.0
  %1264 = vmatprep.subr.mxu0 0.0
  %1265 = vmatpush1.msra.mxu0 0.0
  %1266 = vmatprep.subr.mxu0 0.0
  %1267 = vmatpush1.msra.mxu0 0.0
  %1268 = vmatprep.subr.mxu0 0.0
  %1269 = vmatpush1.msra.mxu0 0.0
  %1270 = vmatprep.subr.mxu0 0.0
  %1271 = vmatpush1.msra.mxu0 0.0
  %1272 = vmatprep.subr.mxu0 0.0
  %1273 = vmatpush1.msra.mxu0 0.0
  %1274 = vmatprep.subr.mxu0 0.0
  %1275 = vmatpush1.msra.mxu0 0.0
  %1276 = vmatprep.subr.mxu0 0.0
  %1277 = vmatpush1.msra.mxu0 0.0
  %1278 = vmatprep.subr.mxu0 0.0
  %1279 = vmatpush1.msra.mxu0 0.0
  %1280 = vmatprep.subr.mxu0 0.0
  %1281 = vmatpush1.msra.mxu0 0.0
  %1282 = vmatprep.mubr.f32.mxu0 0.0
  %1283 = vmatmul.mubr.f32.gmra.mrb[0].mxu0 %v1216
  %v1284 = vpop.f32.mrb[0].mxu0
  %v1285 = vadd.f32 %v1209, %v1284
  %v1286 = vpop.f32.mrb[0].mxu0
  %1287 = vdwg.mxu0
  %v1288 = vadd.f32 %v1285, %v193
  %v1289 = vmul.f32 %v1110, 0.5
  %v1290 = vtanh.pop %v1288
  %v1291 = vmul.f32 %v1290, 0.5
  %v1292 = vadd.f32 %v1289, %v1291
  %v1295 = vunpack.c.l.s4 1966171168
  %v1296 = vunpack.c.0.s8 %v1295
  %v1297 = vlaneseq
  %v1298 = vshrl.u32 %v1297, 7
  %v1299 = vsub.s32 %v1296, %v1298
  %v1300 = vrot.slane %v1292, %v1299
  %v1301 = vcombine.high %v1300, %v1300
  %v1303 = vunpack.c.l.s4 1966171168
  %v1304 = vunpack.c.0.s8 %v1303
  %v1305 = vlaneseq
  %v1306 = vshrl.u32 %v1305, 7
  %v1307 = vsub.s32 %v1304, %v1306
  %v1308 = vrot.slane %v1300, %v1307
  %v1310 = vunpack.c.l.s4 1966171168
  %v1311 = vunpack.c.0.s8 %v1310
  %v1312 = vlaneseq
  %v1313 = vshrl.u32 %v1312, 7
  %v1314 = vsub.s32 %v1311, %v1313
  %v1315 = vrot.slane %v1301, %v1314
  %1318 = vst.msk [vmem:[%s5 + $0x6] sm:$0x1] %vm225, %v1308
  %1319 = vst.msk [vmem:[%s5 + $0xe] sm:$0x1] %vm225, %v1315
  %v1320 = vld [vmem:[%s1 + $0x7] sm:$0x1]
  %v1321 = vld [vmem:[%s1 + $0xf] sm:$0x1]
  %v1322 = vsel %vm37, %v1292, 0
  %1324 = vmatprep.subr.mxu0 0.0
  %1325 = vmatpush1.msra.mxu0 %v29
  %1326 = vmatprep.subr.mxu0 0.0
  %1327 = vmatpush1.msra.mxu0 %v30
  %1328 = vmatprep.subr.mxu0 0.0
  %1329 = vmatpush1.msra.mxu0 %v31
  %1330 = vmatprep.subr.mxu0 0.0
  %1331 = vmatpush1.msra.mxu0 %v32
  %1332 = vmatprep.subr.mxu0 0.0
  %1333 = vmatpush1.msra.mxu0 0.0
  %1334 = vmatprep.subr.mxu0 0.0
  %1335 = vmatpush1.msra.mxu0 0.0
  %1336 = vmatprep.subr.mxu0 0.0
  %1337 = vmatpush1.msra.mxu0 0.0
  %1338 = vmatprep.subr.mxu0 0.0
  %1339 = vmatpush1.msra.mxu0 0.0
  %1340 = vmatprep.subr.mxu0 0.0
  %1341 = vmatpush1.msra.mxu0 0.0
  %1342 = vmatprep.subr.mxu0 0.0
  %1343 = vmatpush1.msra.mxu0 0.0
  %1344 = vmatprep.subr.mxu0 0.0
  %1345 = vmatpush1.msra.mxu0 0.0
  %1346 = vmatprep.subr.mxu0 0.0
  %1347 = vmatpush1.msra.mxu0 0.0
  %1348 = vmatprep.subr.mxu0 0.0
  %1349 = vmatpush1.msra.mxu0 0.0
  %1350 = vmatprep.subr.mxu0 0.0
  %1351 = vmatpush1.msra.mxu0 0.0
  %1352 = vmatprep.subr.mxu0 0.0
  %1353 = vmatpush1.msra.mxu0 0.0
  %1354 = vmatprep.subr.mxu0 0.0
  %1355 = vmatpush1.msra.mxu0 0.0
  %1356 = vmatprep.subr.mxu0 0.0
  %1357 = vmatpush1.msra.mxu0 0.0
  %1358 = vmatprep.subr.mxu0 0.0
  %1359 = vmatpush1.msra.mxu0 0.0
  %1360 = vmatprep.subr.mxu0 0.0
  %1361 = vmatpush1.msra.mxu0 0.0
  %1362 = vmatprep.subr.mxu0 0.0
  %1363 = vmatpush1.msra.mxu0 0.0
  %1364 = vmatprep.subr.mxu0 0.0
  %1365 = vmatpush1.msra.mxu0 0.0
  %1366 = vmatprep.subr.mxu0 0.0
  %1367 = vmatpush1.msra.mxu0 0.0
  %1368 = vmatprep.subr.mxu0 0.0
  %1369 = vmatpush1.msra.mxu0 0.0
  %1370 = vmatprep.subr.mxu0 0.0
  %1371 = vmatpush1.msra.mxu0 0.0
  %1372 = vmatprep.subr.mxu0 0.0
  %1373 = vmatpush1.msra.mxu0 0.0
  %1374 = vmatprep.subr.mxu0 0.0
  %1375 = vmatpush1.msra.mxu0 0.0
  %1376 = vmatprep.subr.mxu0 0.0
  %1377 = vmatpush1.msra.mxu0 0.0
  %1378 = vmatprep.subr.mxu0 0.0
  %1379 = vmatpush1.msra.mxu0 0.0
  %1380 = vmatprep.subr.mxu0 0.0
  %1381 = vmatpush1.msra.mxu0 0.0
  %1382 = vmatprep.subr.mxu0 0.0
  %1383 = vmatpush1.msra.mxu0 0.0
  %1384 = vmatprep.subr.mxu0 0.0
  %1385 = vmatpush1.msra.mxu0 0.0
  %1386 = vmatprep.subr.mxu0 0.0
  %1387 = vmatpush1.msra.mxu0 0.0
  %1388 = vmatprep.mubr.f32.mxu0 0.0
  %1389 = vmatmul.mubr.f32.gmra.mrb[0].mxu0 %v1322
  %v1390 = vpop.f32.mrb[0].mxu0
  %v1391 = vadd.f32 0.0, %v1390
  %v1392 = vpop.f32.mrb[0].mxu0
  %1393 = vdwg.mxu0
  %v1396 = vrot.slane %v1321, 7
  %v1397 = vsel %vm114, %v1396, %v1320
  %v1398 = vsel %vm116, %v1397, 0
  %1400 = vmatprep.subr.mxu0 0.0
  %1401 = vmatpush1.msra.mxu0 %v27
  %1402 = vmatprep.subr.mxu0 0.0
  %1403 = vmatpush1.msra.mxu0 %v28
  %1404 = vmatprep.subr.mxu0 0.0
  %1405 = vmatpush1.msra.mxu0 0.0
  %1406 = vmatprep.subr.mxu0 0.0
  %1407 = vmatpush1.msra.mxu0 0.0
  %1408 = vmatprep.subr.mxu0 0.0
  %1409 = vmatpush1.msra.mxu0 0.0
  %1410 = vmatprep.subr.mxu0 0.0
  %1411 = vmatpush1.msra.mxu0 0.0
  %1412 = vmatprep.subr.mxu0 0.0
  %1413 = vmatpush1.msra.mxu0 0.0
  %1414 = vmatprep.subr.mxu0 0.0
  %1415 = vmatpush1.msra.mxu0 0.0
  %1416 = vmatprep.subr.mxu0 0.0
  %1417 = vmatpush1.msra.mxu0 0.0
  %1418 = vmatprep.subr.mxu0 0.0
  %1419 = vmatpush1.msra.mxu0 0.0
  %1420 = vmatprep.subr.mxu0 0.0
  %1421 = vmatpush1.msra.mxu0 0.0
  %1422 = vmatprep.subr.mxu0 0.0
  %1423 = vmatpush1.msra.mxu0 0.0
  %1424 = vmatprep.subr.mxu0 0.0
  %1425 = vmatpush1.msra.mxu0 0.0
  %1426 = vmatprep.subr.mxu0 0.0
  %1427 = vmatpush1.msra.mxu0 0.0
  %1428 = vmatprep.subr.mxu0 0.0
  %1429 = vmatpush1.msra.mxu0 0.0
  %1430 = vmatprep.subr.mxu0 0.0
  %1431 = vmatpush1.msra.mxu0 0.0
  %1432 = vmatprep.subr.mxu0 0.0
  %1433 = vmatpush1.msra.mxu0 0.0
  %1434 = vmatprep.subr.mxu0 0.0
  %1435 = vmatpush1.msra.mxu0 0.0
  %1436 = vmatprep.subr.mxu0 0.0
  %1437 = vmatpush1.msra.mxu0 0.0
  %1438 = vmatprep.subr.mxu0 0.0
  %1439 = vmatpush1.msra.mxu0 0.0
  %1440 = vmatprep.subr.mxu0 0.0
  %1441 = vmatpush1.msra.mxu0 0.0
  %1442 = vmatprep.subr.mxu0 0.0
  %1443 = vmatpush1.msra.mxu0 0.0
  %1444 = vmatprep.subr.mxu0 0.0
  %1445 = vmatpush1.msra.mxu0 0.0
  %1446 = vmatprep.subr.mxu0 0.0
  %1447 = vmatpush1.msra.mxu0 0.0
  %1448 = vmatprep.subr.mxu0 0.0
  %1449 = vmatpush1.msra.mxu0 0.0
  %1450 = vmatprep.subr.mxu0 0.0
  %1451 = vmatpush1.msra.mxu0 0.0
  %1452 = vmatprep.subr.mxu0 0.0
  %1453 = vmatpush1.msra.mxu0 0.0
  %1454 = vmatprep.subr.mxu0 0.0
  %1455 = vmatpush1.msra.mxu0 0.0
  %1456 = vmatprep.subr.mxu0 0.0
  %1457 = vmatpush1.msra.mxu0 0.0
  %1458 = vmatprep.subr.mxu0 0.0
  %1459 = vmatpush1.msra.mxu0 0.0
  %1460 = vmatprep.subr.mxu0 0.0
  %1461 = vmatpush1.msra.mxu0 0.0
  %1462 = vmatprep.subr.mxu0 0.0
  %1463 = vmatpush1.msra.mxu0 0.0
  %1464 = vmatprep.mubr.f32.mxu0 0.0
  %1465 = vmatmul.mubr.f32.gmra.mrb[0].mxu0 %v1398
  %v1466 = vpop.f32.mrb[0].mxu0
  %v1467 = vadd.f32 %v1391, %v1466
  %v1468 = vpop.f32.mrb[0].mxu0
  %1469 = vdwg.mxu0
  %v1470 = vadd.f32 %v1467, %v193
  %v1471 = vmul.f32 %v1292, 0.5
  %v1472 = vtanh.pop %v1470
  %v1473 = vmul.f32 %v1472, 0.5
  %v1474 = vadd.f32 %v1471, %v1473
  %v1477 = vunpack.c.l.s4 1966171168
  %v1478 = vunpack.c.0.s8 %v1477
  %v1479 = vlaneseq
  %v1480 = vshrl.u32 %v1479, 7
  %v1481 = vsub.s32 %v1478, %v1480
  %v1482 = vrot.slane %v1474, %v1481
  %v1483 = vcombine.high %v1482, %v1482
  %v1485 = vunpack.c.l.s4 1966171168
  %v1486 = vunpack.c.0.s8 %v1485
  %v1487 = vlaneseq
  %v1488 = vshrl.u32 %v1487, 7
  %v1489 = vsub.s32 %v1486, %v1488
  %v1490 = vrot.slane %v1482, %v1489
  %v1492 = vunpack.c.l.s4 1966171168
  %v1493 = vunpack.c.0.s8 %v1492
  %v1494 = vlaneseq
  %v1495 = vshrl.u32 %v1494, 7
  %v1496 = vsub.s32 %v1493, %v1495
  %v1497 = vrot.slane %v1483, %v1496
  %1500 = vst.msk [vmem:[%s5 + $0x7] sm:$0x1] %vm225, %v1490
  %1501 = vst.msk [vmem:[%s5 + $0xf] sm:$0x1] %vm225, %v1497
  %vm1502 = vcmask 254976
  %1503 = vst.msk [vmem:[#allocation2] sm:$0x3] %vm1502, %v1474
  // Predicated region
  $region26: #{mtrnn_forward.1} parent=0 // pred_check
    _
  $region27: #{mtrnn_forward.1} parent=0 // pred_check_branch
    %1505 = sbr.rel (0) target = $region29
  $region28: #{mtrnn_forward.1} parent=0 // pred_region
    _
  $region29: #{mtrnn_forward.1} parent=0 // pred_fallthru
    _
  // Predicated region
  $region30: #{mtrnn_forward.1} parent=0 // pred_check
    _
  $region31: #{mtrnn_forward.1} parent=0 // pred_check_branch
    %1507 = sbr.rel (0) target = $region33
  $region32: #{mtrnn_forward.1} parent=0 // pred_region
    _
  $region33: #{mtrnn_forward.1} parent=0 // pred_fallthru
    _

</llo_original>
